<compile_context>
chip_gen: v5e
topology: v5e:2x2
jax: 0.10.0
libtpu: 0.0.40
codegen_flags: <defaults>
</compile_context>

<pallas_src>
import functools

import jax
import jax.numpy as jnp
from jax.experimental import pallas as pl
from jax.experimental.pallas import tpu as pltpu


def _round_up(x, m):
    return ((x + m - 1) // m) * m


def prepack_params(params, hidden_dim, *, use_bf16=True):
    """One-time pad + cast of the weights (hoisted out of the per-call path).

    params:
      w_mean [H+NB, D], b_mean [1, D]   (output_mean Linear, stored [in, out])
      w_pi   [D, D],    b_pi   [1, D]   (output_dropout Linear)
    """
    w_mean, b_mean = params["w_mean"], params["b_mean"]
    w_pi, b_pi = params["w_pi"], params["b_pi"]
    d = w_mean.shape[1]
    d_pad = _round_up(d, 128)
    nb = w_mean.shape[0] - hidden_dim
    wdt = jnp.bfloat16 if use_bf16 else jnp.float32
    packed = {
        # Row-split of output_mean's weight == the torch.cat on the input.
        "w_lat": jnp.pad(w_mean[:hidden_dim], ((0, 0), (0, d_pad - d))).astype(wdt),
        "w_bat": jnp.pad(w_mean[hidden_dim:], ((0, 0), (0, d_pad - d))).astype(wdt),
        "b_mean": jnp.pad(b_mean, ((0, 0), (0, d_pad - d))).astype(jnp.float32),
        "w_pi": jnp.pad(w_pi, ((0, d_pad - d), (0, d_pad - d))).astype(wdt),
        "b_pi": jnp.pad(b_pi, ((0, 0), (0, d_pad - d))).astype(jnp.float32),
    }
    meta = {"hidden_dim": hidden_dim, "batch_num": nb, "output_dim": d,
            "output_dim_padded": d_pad, "use_bf16": use_bf16}
    return packed, meta


def _output_module_kernel(d_valid, wdt,
                          lat_ref, ob_ref, lib_ref,
                          w_lat_ref, w_bat_ref, b_mean_ref, w_pi_ref, b_pi_ref,
                          scale_ref, theta_ref, rate_ref, pi_ref):
    # output_mean: Linear on concat([latent, batch]) == two MXU dots, f32 acc.
    mu = jnp.dot(lat_ref[...].astype(wdt), w_lat_ref[...],
                 preferred_element_type=jnp.float32)
    mu = mu + jnp.dot(ob_ref[...].astype(wdt), w_bat_ref[...],
                      preferred_element_type=jnp.float32)
    mu = mu + b_mean_ref[...]
    px_mu = jnp.maximum(mu, 0.0)                           # ReLU

    d_pad = px_mu.shape[-1]
    # Padded px_mu columns are exactly 0 and ReLU keeps the row-max >= 0, so the
    # max over all (incl. padded) columns is exact.
    m = jnp.max(px_mu, axis=-1, keepdims=True)
    e = jnp.exp(px_mu - m)
    # Reuse the softmax exponentials for theta: exp(px_mu) == e * exp(m); exp(m)
    # is only a [tb, 1] vector.  Uses the UNMASKED e, so padded theta columns
    # equal exp(0) = 1 (benign, padded cols are never consumed).
    theta = e * jnp.exp(m)
    if d_pad != d_valid:
        col = jax.lax.broadcasted_iota(jnp.int32, px_mu.shape, 1)
        e = jnp.where(col < d_valid, e, 0.0)               # mask padded cols for the sum
    denom = jnp.sum(e, axis=-1, keepdims=True)
    # denom is only [tb, 1]: approx=True buys nothing measurable here, and the
    # exact reciprocal keeps softmax rows summing to 1 at f32 precision.
    scale = e * pl.reciprocal(denom, approx=False)

    rate = lib_ref[...] * scale                            # sample_factor=True
    pi = jnp.dot(px_mu.astype(wdt), w_pi_ref[...],
                 preferred_element_type=jnp.float32) + b_pi_ref[...]

    scale_ref[...] = scale.astype(scale_ref.dtype)
    theta_ref[...] = theta.astype(theta_ref.dtype)
    rate_ref[...] = rate.astype(rate_ref.dtype)
    pi_ref[...] = pi.astype(pi_ref.dtype)


def output_module_raw_forward(latent_rep, output_batch, lib, packed, meta,
                              *, batch_tile=None, trim_outputs=False):
    """latent_rep: [B, H], output_batch: [B, NB] (one-hot), lib: [B, 1].

    Returns (px_mu_scale, px_theta, px_mu_rate, px_pi).  By default these are
    the padded [B_pad, D_pad] f32 kernel outputs (no extra XLA slice traffic);
    rows >= B and columns >= output_dim are padding.  Set trim_outputs=True to
    get exact [B, D] arrays (costs one XLA slice per output).
    """
    b, h = latent_rep.shape
    nb = output_batch.shape[1]
    d = meta["output_dim"]
    d_pad = meta["output_dim_padded"]
    wdt = jnp.bfloat16 if meta["use_bf16"] else jnp.float32

    # Batch tile: fill the MXU (up to 256 rows) but keep >= 2 grid steps so the
    # "parallel" axis still shards across v7x's two TensorCores.
    if batch_tile is None:
        batch_tile = min(256, max(8, _round_up(-(-b // 2), 8)))
    tb = min(batch_tile, max(8, _round_up(b, 8)))
    b_pad = _round_up(b, tb)

    lat_p = jnp.pad(latent_rep.astype(jnp.float32), ((0, b_pad - b), (0, 0)))
    ob_p = jnp.pad(output_batch.astype(jnp.float32), ((0, b_pad - b), (0, 0)))
    lib_p = jnp.pad(lib.reshape(b, 1).astype(jnp.float32), ((0, b_pad - b), (0, 0)))

    def batch_spec(shape):
        return pl.BlockSpec(shape, lambda i: (i, 0))

    def resident_spec(shape):
        # Constant index_map -> tile stays VMEM-resident across grid steps.
        return pl.BlockSpec(shape, lambda i: (0, 0))

    grid = (b_pad // tb,)
    wbytes = 2 if meta["use_bf16"] else 4

    # Cost hint for XLA's scheduler.
    flops = 2 * b_pad * (h * d_pad + nb * d_pad + d_pad * d_pad)
    transcendentals = b_pad * (d_pad + 2)                  # one exp pass + exp(m) + rcp
    bytes_accessed = (4 * b_pad * (h + nb + 1)
                      + wbytes * (h + nb + d_pad) * d_pad
                      + 4 * 2 * d_pad
                      + 4 * 4 * b_pad * d_pad)

    # Explicit scoped-VMEM limit (>= the default 32 MiB; raises v5e's 16 MiB).
    vmem_needed = (2 * 4 * tb * (h + nb + 1)               # double-buffered input tiles
                   + 2 * 4 * 4 * tb * d_pad                # 4 f32 output tiles, 2 bufs
                   + 2 * (wbytes * (h + nb + d_pad) * d_pad + 4 * 2 * d_pad))
    vmem_limit = int(min(100 * 1024 * 1024, max(32 * 1024 * 1024, 2 * vmem_needed)))

    out_struct = jax.ShapeDtypeStruct((b_pad, d_pad), jnp.float32)
    kernel = functools.partial(_output_module_kernel, d, wdt)

    outs = pl.pallas_call(
        kernel,
        grid=grid,
        in_specs=[batch_spec((tb, h)), batch_spec((tb, nb)), batch_spec((tb, 1)),
                  resident_spec((h, d_pad)), resident_spec((nb, d_pad)),
                  resident_spec((1, d_pad)), resident_spec((d_pad, d_pad)),
                  resident_spec((1, d_pad))],
        out_specs=[batch_spec((tb, d_pad))] * 4,
        out_shape=[out_struct] * 4,
        compiler_params=pltpu.CompilerParams(
            dimension_semantics=("parallel",),
            vmem_limit_bytes=vmem_limit),
        cost_estimate=pl.CostEstimate(flops=flops, transcendentals=transcendentals,
                                      bytes_accessed=bytes_accessed),
    )(lat_p, ob_p, lib_p,
      packed["w_lat"], packed["w_bat"], packed["b_mean"],
      packed["w_pi"], packed["b_pi"])

    if trim_outputs:
        outs = tuple(o[:b, :d] for o in outs)
    else:
        outs = tuple(outs)
    return outs


def reference_forward(latent_rep, output_batch, lib, params, *, use_bf16=True):
    """Pure-JAX reference mirroring the kernel's dtype strategy."""
    wdt = jnp.bfloat16 if use_bf16 else jnp.float32
    x = jnp.concatenate([latent_rep, output_batch], axis=1)
    mu = jnp.dot(x.astype(wdt), params["w_mean"].astype(wdt),
                 preferred_element_type=jnp.float32) + params["b_mean"]
    px_mu = jnp.maximum(mu, 0.0)
    px_mu_scale = jax.nn.softmax(px_mu, axis=-1)
    px_mu_rate = lib.reshape(-1, 1) * px_mu_scale
    px_theta = jnp.exp(px_mu)
    px_pi = jnp.dot(px_mu.astype(wdt), params["w_pi"].astype(wdt),
                    preferred_element_type=jnp.float32) + params["b_pi"]
    return px_mu_scale, px_theta, px_mu_rate, px_pi


def init_params(key, hidden_dim, output_batch_num, output_dim):
    """Deterministic synthetic init (PyTorch nn.Linear-like uniform scale)."""
    in_dim = hidden_dim + output_batch_num
    k1, k2, k3, k4 = jax.random.split(key, 4)
    b1 = float(in_dim) ** -0.5
    b2 = float(output_dim) ** -0.5
    return {
        "w_mean": jax.random.uniform(k1, (in_dim, output_dim), jnp.float32, -b1, b1),
        "b_mean": jax.random.uniform(k2, (1, output_dim), jnp.float32, -b1, b1),
        "w_pi": jax.random.uniform(k3, (output_dim, output_dim), jnp.float32, -b2, b2),
        "b_pi": jax.random.uniform(k4, (1, output_dim), jnp.float32, -b2, b2),
    }


if __name__ == "__main__":
    # Small shapes consistent with the module: hidden_layer[-1]=128,
    # output_batch_num=8, output_dim=200 (padded to 256 in-kernel),
    # batch=256 (two 128-row grid steps -> both v7x TensorCores busy).
    batch, hidden_dim, output_batch_num, output_dim = 256, 128, 8, 200

    key = jax.random.PRNGKey(0)
    key, k_lat, k_bid, k_lib = jax.random.split(key, 4)
    latent_rep = jax.random.normal(k_lat, (batch, hidden_dim), jnp.float32)
    batch_ids = jax.random.randint(k_bid, (batch,), 0, output_batch_num)
    output_batch = jax.nn.one_hot(batch_ids, output_batch_num, dtype=jnp.float32)
    lib = jax.random.uniform(k_lib, (batch, 1), jnp.float32, 500.0, 2000.0)
    params = init_params(key, hidden_dim, output_batch_num, output_dim)

    # One-time weight prepack (pad to lane-dense 128 multiple + bf16 cast).
    packed, meta = prepack_params(params, hidden_dim)

    outs_padded = output_module_raw_forward(latent_rep, output_batch, lib,
                                            packed, meta)
    outs_padded = jax.block_until_ready(outs_padded)

    # Validation only: slice off the padding here in the test harness (the
    # production path returns the padded blocks and never pays this slice).
    outs = tuple(o[:batch, :output_dim] for o in outs_padded)
    px_mu_scale, px_theta, px_mu_rate, px_pi = outs

    refs = reference_forward(latent_rep, output_batch, lib, params)
    for name, got, ref in zip(("px_mu_scale", "px_theta", "px_mu_rate", "px_pi"),
                              outs, refs):
        assert got.shape == (batch, output_dim), (name, got.shape)
        assert bool(jnp.all(jnp.isfinite(got))), name
        assert bool(jnp.allclose(got, ref, rtol=5e-3, atol=1e-4)), name

    # Module-level invariants: softmax rows sum to 1, scale/theta/rate >= 0.
    assert bool(jnp.allclose(jnp.sum(px_mu_scale, axis=-1), 1.0, atol=1e-3))
    assert bool(jnp.all(px_mu_scale >= 0.0))
    assert bool(jnp.all(px_theta > 0.0))
    assert bool(jnp.all(px_mu_rate >= 0.0))
    print("KERNEL_OK")
</pallas_src>

<mosaic_0001>
module attributes {stable_mosaic.version = 11 : i64} {
  func.func @_output_module_kernel(%arg0: i32, %arg1: memref<128x128xf32, #tpu.memory_space<vmem>>, %arg2: memref<128x8xf32, #tpu.memory_space<vmem>>, %arg3: memref<128x1xf32, #tpu.memory_space<vmem>>, %arg4: memref<128x256xbf16, #tpu.memory_space<vmem>>, %arg5: memref<8x256xbf16, #tpu.memory_space<vmem>>, %arg6: memref<1x256xf32, #tpu.memory_space<vmem>>, %arg7: memref<256x256xbf16, #tpu.memory_space<vmem>>, %arg8: memref<1x256xf32, #tpu.memory_space<vmem>>, %arg9: memref<128x256xf32, #tpu.memory_space<vmem>>, %arg10: memref<128x256xf32, #tpu.memory_space<vmem>>, %arg11: memref<128x256xf32, #tpu.memory_space<vmem>>, %arg12: memref<128x256xf32, #tpu.memory_space<vmem>>) attributes {dimension_semantics = [#tpu.dimension_semantics<parallel>], iteration_bounds = array<i64: 2>, scalar_prefetch = 0 : i64, scratch_operands = 0 : i64, tpu.core_type = #tpu.core_type<tc>, window_params = [{transform_indices = @transform_0, window_bounds = array<i64: 128, 128>}, {transform_indices = @transform_1, window_bounds = array<i64: 128, 8>}, {transform_indices = @transform_2, window_bounds = array<i64: 128, 1>}, {pipeline_mode = #tpu.pipeline_mode<synchronous>, transform_indices = @transform_3, window_bounds = array<i64: 128, 256>}, {pipeline_mode = #tpu.pipeline_mode<synchronous>, transform_indices = @transform_4, window_bounds = array<i64: 8, 256>}, {pipeline_mode = #tpu.pipeline_mode<synchronous>, transform_indices = @transform_5, window_bounds = array<i64: 1, 256>}, {pipeline_mode = #tpu.pipeline_mode<synchronous>, transform_indices = @transform_6, window_bounds = array<i64: 256, 256>}, {pipeline_mode = #tpu.pipeline_mode<synchronous>, transform_indices = @transform_7, window_bounds = array<i64: 1, 256>}, {transform_indices = @transform_8, window_bounds = array<i64: 128, 256>}, {transform_indices = @transform_9, window_bounds = array<i64: 128, 256>}, {transform_indices = @transform_10, window_bounds = array<i64: 128, 256>}, {transform_indices = @transform_11, window_bounds = array<i64: 128, 256>}]} {
    %c0 = arith.constant 0 : index
    %c0_0 = arith.constant 0 : index
    %0 = vector.load %arg1[%c0, %c0_0] : memref<128x128xf32, #tpu.memory_space<vmem>>, vector<128x128xf32>
    %1 = arith.truncf %0 : vector<128x128xf32> to vector<128x128xbf16>
    %c0_1 = arith.constant 0 : index
    %c0_2 = arith.constant 0 : index
    %2 = vector.load %arg4[%c0_1, %c0_2] : memref<128x256xbf16, #tpu.memory_space<vmem>>, vector<128x256xbf16>
    %cst = arith.constant dense<0.000000e+00> : vector<128x256xf32>
    %3 = tpu.matmul %1, %2, %cst {dimension_numbers = #tpu.dot_dimension_numbers<[1], [0], [0], [1], [0, 0, 1, 1], [], []>} : vector<128x128xbf16>, vector<128x256xbf16>, vector<128x256xf32> -> vector<128x256xf32>
    %c0_3 = arith.constant 0 : index
    %c0_4 = arith.constant 0 : index
    %4 = vector.load %arg2[%c0_3, %c0_4] : memref<128x8xf32, #tpu.memory_space<vmem>>, vector<128x8xf32>
    %5 = arith.truncf %4 : vector<128x8xf32> to vector<128x8xbf16>
    %c0_5 = arith.constant 0 : index
    %c0_6 = arith.constant 0 : index
    %6 = vector.load %arg5[%c0_5, %c0_6] : memref<8x256xbf16, #tpu.memory_space<vmem>>, vector<8x256xbf16>
    %cst_7 = arith.constant dense<0.000000e+00> : vector<128x256xf32>
    %7 = tpu.matmul %5, %6, %cst_7 {dimension_numbers = #tpu.dot_dimension_numbers<[1], [0], [0], [1], [0, 0, 1, 1], [], []>} : vector<128x8xbf16>, vector<8x256xbf16>, vector<128x256xf32> -> vector<128x256xf32>
    %8 = arith.addf %3, %7 : vector<128x256xf32>
    %c0_8 = arith.constant 0 : index
    %c0_9 = arith.constant 0 : index
    %9 = vector.load %arg6[%c0_8, %c0_9] : memref<1x256xf32, #tpu.memory_space<vmem>>, vector<1x256xf32>
    %10 = vector.broadcast %9 : vector<1x256xf32> to vector<128x256xf32>
    %11 = arith.addf %8, %10 : vector<128x256xf32>
    %cst_10 = arith.constant 0.000000e+00 : f32
    %12 = vector.broadcast %cst_10 : f32 to vector<128x256xf32>
    %13 = arith.maximumf %11, %12 : vector<128x256xf32>
    %cst_11 = arith.constant dense<0xFF800000> : vector<128xf32>
    %14 = vector.multi_reduction <maximumf>, %13, %cst_11 [1] : vector<128x256xf32> to vector<128xf32>
    %15 = vector.shape_cast %14 : vector<128xf32> to vector<128x1xf32>
    %16 = vector.broadcast %15 : vector<128x1xf32> to vector<128x256xf32>
    %17 = arith.subf %13, %16 : vector<128x256xf32>
    %18 = math.exp %17 : vector<128x256xf32>
    %19 = math.exp %15 : vector<128x1xf32>
    %20 = vector.broadcast %19 : vector<128x1xf32> to vector<128x256xf32>
    %21 = arith.mulf %18, %20 : vector<128x256xf32>
    %22 = tpu.iota {dimensions = array<i32: 1>} : vector<128x256xi32>
    %c200_i32 = arith.constant 200 : i32
    %23 = vector.broadcast %c200_i32 : i32 to vector<128x256xi32>
    %24 = arith.cmpi slt, %22, %23 : vector<128x256xi32>
    %cst_12 = arith.constant 0.000000e+00 : f32
    %25 = vector.broadcast %cst_12 : f32 to vector<128x256xf32>
    %26 = arith.select %24, %18, %25 : vector<128x256xi1>, vector<128x256xf32>
    %cst_13 = arith.constant dense<0.000000e+00> : vector<128xf32>
    %27 = vector.multi_reduction <add>, %26, %cst_13 [1] : vector<128x256xf32> to vector<128xf32>
    %28 = vector.shape_cast %27 : vector<128xf32> to vector<128x1xf32>
    %29 = tpu.reciprocal %28 : vector<128x1xf32> -> vector<128x1xf32>
    %30 = vector.broadcast %29 : vector<128x1xf32> to vector<128x256xf32>
    %31 = arith.mulf %26, %30 : vector<128x256xf32>
    %c0_14 = arith.constant 0 : index
    %c0_15 = arith.constant 0 : index
    %32 = vector.load %arg3[%c0_14, %c0_15] : memref<128x1xf32, #tpu.memory_space<vmem>>, vector<128x1xf32>
    %33 = vector.broadcast %32 : vector<128x1xf32> to vector<128x256xf32>
    %34 = arith.mulf %33, %31 : vector<128x256xf32>
    %35 = arith.truncf %13 : vector<128x256xf32> to vector<128x256xbf16>
    %c0_16 = arith.constant 0 : index
    %c0_17 = arith.constant 0 : index
    %36 = vector.load %arg7[%c0_16, %c0_17] : memref<256x256xbf16, #tpu.memory_space<vmem>>, vector<256x256xbf16>
    %cst_18 = arith.constant dense<0.000000e+00> : vector<128x256xf32>
    %37 = tpu.matmul %35, %36, %cst_18 {dimension_numbers = #tpu.dot_dimension_numbers<[1], [0], [0], [1], [0, 0, 1, 1], [], []>} : vector<128x256xbf16>, vector<256x256xbf16>, vector<128x256xf32> -> vector<128x256xf32>
    %c0_19 = arith.constant 0 : index
    %c0_20 = arith.constant 0 : index
    %38 = vector.load %arg8[%c0_19, %c0_20] : memref<1x256xf32, #tpu.memory_space<vmem>>, vector<1x256xf32>
    %39 = vector.broadcast %38 : vector<1x256xf32> to vector<128x256xf32>
    %40 = arith.addf %37, %39 : vector<128x256xf32>
    %c0_21 = arith.constant 0 : index
    %c0_22 = arith.constant 0 : index
    %41 = vector.load %arg9[%c0_21, %c0_22] : memref<128x256xf32, #tpu.memory_space<vmem>>, vector<128x256xf32>
    tpu.vector_store %arg9[%c0_21, %c0_22], %31 {strides = array<i32>} : memref<128x256xf32, #tpu.memory_space<vmem>>, vector<128x256xf32>,
    %c0_23 = arith.constant 0 : index
    %c0_24 = arith.constant 0 : index
    %42 = vector.load %arg10[%c0_23, %c0_24] : memref<128x256xf32, #tpu.memory_space<vmem>>, vector<128x256xf32>
    tpu.vector_store %arg10[%c0_23, %c0_24], %21 {strides = array<i32>} : memref<128x256xf32, #tpu.memory_space<vmem>>, vector<128x256xf32>,
    %c0_25 = arith.constant 0 : index
    %c0_26 = arith.constant 0 : index
    %43 = vector.load %arg11[%c0_25, %c0_26] : memref<128x256xf32, #tpu.memory_space<vmem>>, vector<128x256xf32>
    tpu.vector_store %arg11[%c0_25, %c0_26], %34 {strides = array<i32>} : memref<128x256xf32, #tpu.memory_space<vmem>>, vector<128x256xf32>,
    %c0_27 = arith.constant 0 : index
    %c0_28 = arith.constant 0 : index
    %44 = vector.load %arg12[%c0_27, %c0_28] : memref<128x256xf32, #tpu.memory_space<vmem>>, vector<128x256xf32>
    tpu.vector_store %arg12[%c0_27, %c0_28], %40 {strides = array<i32>} : memref<128x256xf32, #tpu.memory_space<vmem>>, vector<128x256xf32>,
    return
  }
  func.func @transform_0(%arg0: i32) -> (i32, i32) {
    %c0_i32 = arith.constant 0 : i32
    %c0_i32_0 = arith.constant 0 : i32
    return %arg0, %c0_i32 : i32, i32
  }
  func.func @transform_1(%arg0: i32) -> (i32, i32) {
    %c0_i32 = arith.constant 0 : i32
    %c0_i32_0 = arith.constant 0 : i32
    return %arg0, %c0_i32 : i32, i32
  }
  func.func @transform_2(%arg0: i32) -> (i32, i32) {
    %c0_i32 = arith.constant 0 : i32
    %c0_i32_0 = arith.constant 0 : i32
    return %arg0, %c0_i32 : i32, i32
  }
  func.func @transform_3(%arg0: i32) -> (i32, i32) {
    %c0_i32 = arith.constant 0 : i32
    %c0_i32_0 = arith.constant 0 : i32
    %c0_i32_1 = arith.constant 0 : i32
    return %c0_i32, %c0_i32_0 : i32, i32
  }
  func.func @transform_4(%arg0: i32) -> (i32, i32) {
    %c0_i32 = arith.constant 0 : i32
    %c0_i32_0 = arith.constant 0 : i32
    %c0_i32_1 = arith.constant 0 : i32
    return %c0_i32, %c0_i32_0 : i32, i32
  }
  func.func @transform_5(%arg0: i32) -> (i32, i32) {
    %c0_i32 = arith.constant 0 : i32
    %c0_i32_0 = arith.constant 0 : i32
    %c0_i32_1 = arith.constant 0 : i32
    return %c0_i32, %c0_i32_0 : i32, i32
  }
  func.func @transform_6(%arg0: i32) -> (i32, i32) {
    %c0_i32 = arith.constant 0 : i32
    %c0_i32_0 = arith.constant 0 : i32
    %c0_i32_1 = arith.constant 0 : i32
    return %c0_i32, %c0_i32_0 : i32, i32
  }
  func.func @transform_7(%arg0: i32) -> (i32, i32) {
    %c0_i32 = arith.constant 0 : i32
    %c0_i32_0 = arith.constant 0 : i32
    %c0_i32_1 = arith.constant 0 : i32
    return %c0_i32, %c0_i32_0 : i32, i32
  }
  func.func @transform_8(%arg0: i32) -> (i32, i32) {
    %c0_i32 = arith.constant 0 : i32
    %c0_i32_0 = arith.constant 0 : i32
    return %arg0, %c0_i32 : i32, i32
  }
  func.func @transform_9(%arg0: i32) -> (i32, i32) {
    %c0_i32 = arith.constant 0 : i32
    %c0_i32_0 = arith.constant 0 : i32
    return %arg0, %c0_i32 : i32, i32
  }
  func.func @transform_10(%arg0: i32) -> (i32, i32) {
    %c0_i32 = arith.constant 0 : i32
    %c0_i32_0 = arith.constant 0 : i32
    return %arg0, %c0_i32 : i32, i32
  }
  func.func @transform_11(%arg0: i32) -> (i32, i32) {
    %c0_i32 = arith.constant 0 : i32
    %c0_i32_0 = arith.constant 0 : i32
    return %arg0, %c0_i32 : i32, i32
  }
}

</mosaic_0001>

<llo_original>
// kernel: tpu_custom_call.1
$region0: #{tpu_custom_call.1}
  #allocation0 [shape = 'u32[]', space=smem, size = 0x4, offset = 0x4, fixed_abs, tag = 'smem constant byte address 0x4 - core index']
  #allocation1 [shape = 'u32[72,128]{1,0:T(1,128)}', space=vmem, size = 0x9000, scoped, tag = 'internal scratch']
  %s0 = inlined_call_operand.vmem [shape: f32[256,128], index: 0, kind: input, shape index: {}]
  %s1 = inlined_call_operand.vmem [shape: f32[256,8], index: 1, kind: input, shape index: {}]
  %s2 = inlined_call_operand.vmem [shape: f32[256,1], index: 2, kind: input, shape index: {}]
  %s3 = inlined_call_operand.hbm [shape: bf16[128,256], index: 3, kind: input, shape index: {}]
  %s4 = inlined_call_operand.vmem [shape: bf16[8,256], index: 4, kind: input, shape index: {}]
  %s5 = inlined_call_operand.vmem [shape: f32[1,256], index: 5, kind: input, shape index: {}]
  %s6 = inlined_call_operand.vmem [shape: bf16[256,256], index: 6, kind: input, shape index: {}]
  %s7 = inlined_call_operand.vmem [shape: f32[1,256], index: 7, kind: input, shape index: {}]
  %s8 = inlined_call_operand.hbm [shape: f32[256,256], index: 8, kind: output, shape index: {0}]
  %s9 = inlined_call_operand.hbm [shape: f32[256,256], index: 9, kind: output, shape index: {1}]
  %s10 = inlined_call_operand.hbm [shape: f32[256,256], index: 10, kind: output, shape index: {2}]
  %s11 = inlined_call_operand.hbm [shape: f32[256,256], index: 11, kind: output, shape index: {3}]
  %12 = xla_tuple %s8, %s9, %s10, %s11
  %s13 = sld [smem:[#allocation0]]
  $region93: #{tpu_custom_call.1} parent=0
    _
  %s15 = ssub.s32 1, %s13
  %s16 = scalar_select 0, %s15, %s13
  $region1: #{tpu_custom_call.1} parent=0
    #allocation2 [shape = 'u8[65536]{0}', space=vmem, size = 0x10000, scoped, tag = 'input window, operand 3, single buffered']
    #allocation3 [shape = 's32[2]{0}', space=sflag, size = 0x8, scoped, tag = 'scoped memory for tpu_custom_call.1']
    #allocation4 [shape = 's32[2]{0}', space=sflag, size = 0x8, scoped, tag = 'scoped memory for tpu_custom_call.1']
    #allocation5 [shape = 'u8[262144]{0}', space=vmem, size = 0x40000, scoped, tag = 'output window, operand 0']
    #allocation6 [shape = 'u8[262144]{0}', space=vmem, size = 0x40000, scoped, tag = 'output window, operand 1']
    #allocation7 [shape = 's32[2]{0}', space=sflag, size = 0x8, scoped, tag = 'scoped memory for tpu_custom_call.1']
    #allocation8 [shape = 'u8[262144]{0}', space=vmem, size = 0x40000, scoped, tag = 'output window, operand 2']
    #allocation9 [shape = 'u8[262144]{0}', space=vmem, size = 0x40000, scoped, tag = 'output window, operand 3']
    #allocation10 [shape = 's32[2]{0}', space=sflag, size = 0x8, scoped, tag = 'scoped memory for tpu_custom_call.1']
    %17 = vsyncpa [#allocation3], 0
    %18 = vsyncpa [#allocation4], 0
    %s19 = scalar_lea.sflag [#allocation4], 1
    %20 = vsyncpa %s19, 0
    %21 = vsyncpa [#allocation7], 0
    %s22 = scalar_lea.sflag [#allocation7], 1
    %23 = vsyncpa %s22, 0
    %24 = vsyncpa [#allocation10], 0
    %s25 = scalar_lea.sflag [#allocation10], 1
    %26 = vsyncpa %s25, 0
    loop: start=0, step=1, limit=4
    $region2: #{tpu_custom_call.1} parent=1 // loop_pre_header
      _
    $region3: #{tpu_custom_call.1} parent=1 // loop_header
      %s28 = sphi 0, %s32
      %p29 = scmp.ge.s32.totalorder %s28, 4
      %s38 = sphi 0, %s40
      %s41 = sphi 0, %s38
      %s42 = sphi 0, %s41
      %s58 = sphi 0, %s42
      %s64 = sphi 0, %s66
      %s67 = sphi 0, %s64
      %s68 = sphi 0, %s67
      %s84 = sphi 0, %s68
      %s90 = sphi 0, %s92
      %s93 = sphi 0, %s90
      %s94 = sphi 0, %s93
      %s110 = sphi 0, %s94
      %s114 = sphi 0, %s114
      %s116 = sphi 0, %s114
      %s117 = sphi 0, %s116
      %s131 = sphi 0, %s117
      %s135 = sphi 0, %s135
      %s137 = sphi 0, %s135
      %s138 = sphi 0, %s137
      %s152 = sphi 0, %s138
      %s156 = sphi 0, %s156
      %s158 = sphi 0, %s156
      %s159 = sphi 0, %s158
      %s173 = sphi 0, %s159
      %s177 = sphi 0, %s177
      %s179 = sphi 0, %s177
      %s180 = sphi 0, %s179
      %s194 = sphi 0, %s180
      %s198 = sphi 0, %s198
      %s200 = sphi 0, %s198
      %s201 = sphi 0, %s200
      %s215 = sphi 0, %s201
      %s221 = sphi 0, %s223
      %s224 = sphi 0, %s221
      %s225 = sphi 0, %s224
      %s241 = sphi 0, %s225
      %s247 = sphi 0, %s249
      %s250 = sphi 0, %s247
      %s251 = sphi 0, %s250
      %s267 = sphi 0, %s251
      %s273 = sphi 0, %s275
      %s276 = sphi 0, %s273
      %s277 = sphi 0, %s276
      %s293 = sphi 0, %s277
      %s299 = sphi 0, %s301
      %s302 = sphi 0, %s299
      %s303 = sphi 0, %s302
      %s319 = sphi 0, %s303
    $region4: #{tpu_custom_call.1} parent=1 // loop_header_branch
      %31 = sbr.rel (%p29) target = $region8
    $region5: #{tpu_custom_call.1} parent=1 // loop_body
      %s33 = ssub.s32 %s28, 1
      %s34 = ssub.s32 %s28, 2
      %s35 = sadd.s32 %s28, 1
      %s36 = ssub.s32 %s28, %s35
      %p37 = scmp.eq.s32.totalorder %s36, 0
      %s39 = sadd.s32 %s38, 1
      %s40 = scalar_select %p37, %s38, %s39
      %p43 = pneg %p37
      %p44 = scmp.eq.s32.totalorder %s28, 1
      %p45 = por %p43, %p44
      %p46 = scmp.ne.s32.totalorder %s38, %s41
      %p47 = scmp.eq.s32.totalorder %s28, 0
      %p48 = por %p46, %p47
      %p49 = scmp.ne.s32.totalorder %s38, %s41
      %p50 = scmp.eq.s32.totalorder %s33, 1
      %p51 = por %p49, %p50
      %p52 = scmp.ne.s32.totalorder %s41, %s42
      %p53 = scmp.eq.s32.totalorder %s33, 0
      %p54 = por %p52, %p53
      %p55 = scmp.ne.s32.totalorder %s41, %s42
      %p56 = scmp.eq.s32.totalorder %s34, 1
      %p57 = por %p55, %p56
      %p59 = scmp.ne.s32.totalorder %s42, %s58
      %p60 = scmp.eq.s32.totalorder %s34, 0
      %p61 = por %p59, %p60
      %s62 = ssub.s32 %s28, %s35
      %p63 = scmp.eq.s32.totalorder %s62, 0
      %s65 = sadd.s32 %s64, 1
      %s66 = scalar_select %p63, %s64, %s65
      %p69 = pneg %p63
      %p70 = scmp.eq.s32.totalorder %s28, 1
      %p71 = por %p69, %p70
      %p72 = scmp.ne.s32.totalorder %s64, %s67
      %p73 = scmp.eq.s32.totalorder %s28, 0
      %p74 = por %p72, %p73
      %p75 = scmp.ne.s32.totalorder %s64, %s67
      %p76 = scmp.eq.s32.totalorder %s33, 1
      %p77 = por %p75, %p76
      %p78 = scmp.ne.s32.totalorder %s67, %s68
      %p79 = scmp.eq.s32.totalorder %s33, 0
      %p80 = por %p78, %p79
      %p81 = scmp.ne.s32.totalorder %s67, %s68
      %p82 = scmp.eq.s32.totalorder %s34, 1
      %p83 = por %p81, %p82
      %p85 = scmp.ne.s32.totalorder %s68, %s84
      %p86 = scmp.eq.s32.totalorder %s34, 0
      %p87 = por %p85, %p86
      %s88 = ssub.s32 %s28, %s35
      %p89 = scmp.eq.s32.totalorder %s88, 0
      %s91 = sadd.s32 %s90, 1
      %s92 = scalar_select %p89, %s90, %s91
      %p95 = pneg %p89
      %p96 = scmp.eq.s32.totalorder %s28, 1
      %p97 = por %p95, %p96
      %p98 = scmp.ne.s32.totalorder %s90, %s93
      %p99 = scmp.eq.s32.totalorder %s28, 0
      %p100 = por %p98, %p99
      %p101 = scmp.ne.s32.totalorder %s90, %s93
      %p102 = scmp.eq.s32.totalorder %s33, 1
      %p103 = por %p101, %p102
      %p104 = scmp.ne.s32.totalorder %s93, %s94
      %p105 = scmp.eq.s32.totalorder %s33, 0
      %p106 = por %p104, %p105
      %p107 = scmp.ne.s32.totalorder %s93, %s94
      %p108 = scmp.eq.s32.totalorder %s34, 1
      %p109 = por %p107, %p108
      %p111 = scmp.ne.s32.totalorder %s94, %s110
      %p112 = scmp.eq.s32.totalorder %s34, 0
      %p113 = por %p111, %p112
      %s115 = sadd.s32 %s114, 1
      %p118 = scmp.eq.s32.totalorder %s28, 1
      %p119 = scmp.ne.s32.totalorder %s114, %s116
      %p120 = scmp.eq.s32.totalorder %s28, 0
      %p121 = por %p119, %p120
      %p122 = scmp.ne.s32.totalorder %s114, %s116
      %p123 = scmp.eq.s32.totalorder %s33, 1
      %p124 = por %p122, %p123
      %p125 = scmp.ne.s32.totalorder %s116, %s117
      %p126 = scmp.eq.s32.totalorder %s33, 0
      %p127 = por %p125, %p126
      %p128 = scmp.ne.s32.totalorder %s116, %s117
      %p129 = scmp.eq.s32.totalorder %s34, 1
      %p130 = por %p128, %p129
      %p132 = scmp.ne.s32.totalorder %s117, %s131
      %p133 = scmp.eq.s32.totalorder %s34, 0
      %p134 = por %p132, %p133
      %s136 = sadd.s32 %s135, 1
      %p139 = scmp.eq.s32.totalorder %s28, 1
      %p140 = scmp.ne.s32.totalorder %s135, %s137
      %p141 = scmp.eq.s32.totalorder %s28, 0
      %p142 = por %p140, %p141
      %p143 = scmp.ne.s32.totalorder %s135, %s137
      %p144 = scmp.eq.s32.totalorder %s33, 1
      %p145 = por %p143, %p144
      %p146 = scmp.ne.s32.totalorder %s137, %s138
      %p147 = scmp.eq.s32.totalorder %s33, 0
      %p148 = por %p146, %p147
      %p149 = scmp.ne.s32.totalorder %s137, %s138
      %p150 = scmp.eq.s32.totalorder %s34, 1
      %p151 = por %p149, %p150
      %p153 = scmp.ne.s32.totalorder %s138, %s152
      %p154 = scmp.eq.s32.totalorder %s34, 0
      %p155 = por %p153, %p154
      %s157 = sadd.s32 %s156, 1
      %p160 = scmp.eq.s32.totalorder %s28, 1
      %p161 = scmp.ne.s32.totalorder %s156, %s158
      %p162 = scmp.eq.s32.totalorder %s28, 0
      %p163 = por %p161, %p162
      %p164 = scmp.ne.s32.totalorder %s156, %s158
      %p165 = scmp.eq.s32.totalorder %s33, 1
      %p166 = por %p164, %p165
      %p167 = scmp.ne.s32.totalorder %s158, %s159
      %p168 = scmp.eq.s32.totalorder %s33, 0
      %p169 = por %p167, %p168
      %p170 = scmp.ne.s32.totalorder %s158, %s159
      %p171 = scmp.eq.s32.totalorder %s34, 1
      %p172 = por %p170, %p171
      %p174 = scmp.ne.s32.totalorder %s159, %s173
      %p175 = scmp.eq.s32.totalorder %s34, 0
      %p176 = por %p174, %p175
      %s178 = sadd.s32 %s177, 1
      %p181 = scmp.eq.s32.totalorder %s28, 1
      %p182 = scmp.ne.s32.totalorder %s177, %s179
      %p183 = scmp.eq.s32.totalorder %s28, 0
      %p184 = por %p182, %p183
      %p185 = scmp.ne.s32.totalorder %s177, %s179
      %p186 = scmp.eq.s32.totalorder %s33, 1
      %p187 = por %p185, %p186
      %p188 = scmp.ne.s32.totalorder %s179, %s180
      %p189 = scmp.eq.s32.totalorder %s33, 0
      %p190 = por %p188, %p189
      %p191 = scmp.ne.s32.totalorder %s179, %s180
      %p192 = scmp.eq.s32.totalorder %s34, 1
      %p193 = por %p191, %p192
      %p195 = scmp.ne.s32.totalorder %s180, %s194
      %p196 = scmp.eq.s32.totalorder %s34, 0
      %p197 = por %p195, %p196
      %s199 = sadd.s32 %s198, 1
      %p202 = scmp.eq.s32.totalorder %s28, 1
      %p203 = scmp.ne.s32.totalorder %s198, %s200
      %p204 = scmp.eq.s32.totalorder %s28, 0
      %p205 = por %p203, %p204
      %p206 = scmp.ne.s32.totalorder %s198, %s200
      %p207 = scmp.eq.s32.totalorder %s33, 1
      %p208 = por %p206, %p207
      %p209 = scmp.ne.s32.totalorder %s200, %s201
      %p210 = scmp.eq.s32.totalorder %s33, 0
      %p211 = por %p209, %p210
      %p212 = scmp.ne.s32.totalorder %s200, %s201
      %p213 = scmp.eq.s32.totalorder %s34, 1
      %p214 = por %p212, %p213
      %p216 = scmp.ne.s32.totalorder %s201, %s215
      %p217 = scmp.eq.s32.totalorder %s34, 0
      %p218 = por %p216, %p217
      %s219 = ssub.s32 %s28, %s35
      %p220 = scmp.eq.s32.totalorder %s219, 0
      %s222 = sadd.s32 %s221, 1
      %s223 = scalar_select %p220, %s221, %s222
      %p226 = pneg %p220
      %p227 = scmp.eq.s32.totalorder %s28, 1
      %p228 = por %p226, %p227
      %p229 = scmp.ne.s32.totalorder %s221, %s224
      %p230 = scmp.eq.s32.totalorder %s28, 0
      %p231 = por %p229, %p230
      %p232 = scmp.ne.s32.totalorder %s221, %s224
      %p233 = scmp.eq.s32.totalorder %s33, 1
      %p234 = por %p232, %p233
      %p235 = scmp.ne.s32.totalorder %s224, %s225
      %p236 = scmp.eq.s32.totalorder %s33, 0
      %p237 = por %p235, %p236
      %p238 = scmp.ne.s32.totalorder %s224, %s225
      %p239 = scmp.eq.s32.totalorder %s34, 1
      %p240 = por %p238, %p239
      %p242 = scmp.ne.s32.totalorder %s225, %s241
      %p243 = scmp.eq.s32.totalorder %s34, 0
      %p244 = por %p242, %p243
      %s245 = ssub.s32 %s28, %s35
      %p246 = scmp.eq.s32.totalorder %s245, 0
      %s248 = sadd.s32 %s247, 1
      %s249 = scalar_select %p246, %s247, %s248
      %p252 = pneg %p246
      %p253 = scmp.eq.s32.totalorder %s28, 1
      %p254 = por %p252, %p253
      %p255 = scmp.ne.s32.totalorder %s247, %s250
      %p256 = scmp.eq.s32.totalorder %s28, 0
      %p257 = por %p255, %p256
      %p258 = scmp.ne.s32.totalorder %s247, %s250
      %p259 = scmp.eq.s32.totalorder %s33, 1
      %p260 = por %p258, %p259
      %p261 = scmp.ne.s32.totalorder %s250, %s251
      %p262 = scmp.eq.s32.totalorder %s33, 0
      %p263 = por %p261, %p262
      %p264 = scmp.ne.s32.totalorder %s250, %s251
      %p265 = scmp.eq.s32.totalorder %s34, 1
      %p266 = por %p264, %p265
      %p268 = scmp.ne.s32.totalorder %s251, %s267
      %p269 = scmp.eq.s32.totalorder %s34, 0
      %p270 = por %p268, %p269
      %s271 = ssub.s32 %s28, %s35
      %p272 = scmp.eq.s32.totalorder %s271, 0
      %s274 = sadd.s32 %s273, 1
      %s275 = scalar_select %p272, %s273, %s274
      %p278 = pneg %p272
      %p279 = scmp.eq.s32.totalorder %s28, 1
      %p280 = por %p278, %p279
      %p281 = scmp.ne.s32.totalorder %s273, %s276
      %p282 = scmp.eq.s32.totalorder %s28, 0
      %p283 = por %p281, %p282
      %p284 = scmp.ne.s32.totalorder %s273, %s276
      %p285 = scmp.eq.s32.totalorder %s33, 1
      %p286 = por %p284, %p285
      %p287 = scmp.ne.s32.totalorder %s276, %s277
      %p288 = scmp.eq.s32.totalorder %s33, 0
      %p289 = por %p287, %p288
      %p290 = scmp.ne.s32.totalorder %s276, %s277
      %p291 = scmp.eq.s32.totalorder %s34, 1
      %p292 = por %p290, %p291
      %p294 = scmp.ne.s32.totalorder %s277, %s293
      %p295 = scmp.eq.s32.totalorder %s34, 0
      %p296 = por %p294, %p295
      %s297 = ssub.s32 %s28, %s35
      %p298 = scmp.eq.s32.totalorder %s297, 0
      %s300 = sadd.s32 %s299, 1
      %s301 = scalar_select %p298, %s299, %s300
      %p304 = pneg %p298
      %p305 = scmp.eq.s32.totalorder %s28, 1
      %p306 = por %p304, %p305
      %p307 = scmp.ne.s32.totalorder %s299, %s302
      %p308 = scmp.eq.s32.totalorder %s28, 0
      %p309 = por %p307, %p308
      %p310 = scmp.ne.s32.totalorder %s299, %s302
      %p311 = scmp.eq.s32.totalorder %s33, 1
      %p312 = por %p310, %p311
      %p313 = scmp.ne.s32.totalorder %s302, %s303
      %p314 = scmp.eq.s32.totalorder %s33, 0
      %p315 = por %p313, %p314
      %p316 = scmp.ne.s32.totalorder %s302, %s303
      %p317 = scmp.eq.s32.totalorder %s34, 1
      %p318 = por %p316, %p317
      %p320 = scmp.ne.s32.totalorder %s303, %s319
      %p321 = scmp.eq.s32.totalorder %s34, 0
      %p322 = por %p320, %p321
      %p323 = scmp.le.s32.totalorder 1, %s28
      %p324 = scmp.lt.s32.totalorder %s28, 3
      %p325 = pnand %p323, %p324
      %p326 = pneg %p325
      // Predicated region
      $region9: #{tpu_custom_call.1} parent=5 // pred_check
        _
      $region10: #{tpu_custom_call.1} parent=5 // pred_check_branch
        %328 = sbr.rel (%p325) target = $region12
      $region11: #{tpu_custom_call.1} parent=5 // pred_region
        %s329 = ssub.s32 %s28, 1
        // Predicated region
        $region13: #{tpu_custom_call.1} parent=11 // pred_check
          %p330 = pneg %p127
        $region14: #{tpu_custom_call.1} parent=11 // pred_check_branch
          %332 = sbr.rel (%p330) target = $region16
        $region15: #{tpu_custom_call.1} parent=11 // pred_region
          %334 = vsyncadd [#allocation3], 0
          %s335 = sshll.u32 %s3, 4
          %s336 = int_to_ptr.hbm [resolvable:$true] %s335
          %s337 = sshll.u32 [#allocation2], 4
          %s338 = int_to_ptr.vmem [resolvable:$true] %s337
          %343 = dma.hbm_to_vmem [thread:$0]  %s336, 2048, %s338, [#allocation3], 128, 128, 8
        $region16: #{tpu_custom_call.1} parent=11 // pred_fallthru
          _
        // Predicated region
        $region17: #{tpu_custom_call.1} parent=11 // pred_check
          %p344 = pneg %p148
        $region18: #{tpu_custom_call.1} parent=11 // pred_check_branch
          %346 = sbr.rel (%p344) target = $region20
        $region19: #{tpu_custom_call.1} parent=11 // pred_region
          _
        $region20: #{tpu_custom_call.1} parent=11 // pred_fallthru
          _
        // Predicated region
        $region21: #{tpu_custom_call.1} parent=11 // pred_check
          %p347 = pneg %p169
        $region22: #{tpu_custom_call.1} parent=11 // pred_check_branch
          %349 = sbr.rel (%p347) target = $region24
        $region23: #{tpu_custom_call.1} parent=11 // pred_region
          _
        $region24: #{tpu_custom_call.1} parent=11 // pred_fallthru
          _
        // Predicated region
        $region25: #{tpu_custom_call.1} parent=11 // pred_check
          %p350 = pneg %p190
        $region26: #{tpu_custom_call.1} parent=11 // pred_check_branch
          %352 = sbr.rel (%p350) target = $region28
        $region27: #{tpu_custom_call.1} parent=11 // pred_region
          _
        $region28: #{tpu_custom_call.1} parent=11 // pred_fallthru
          _
        // Predicated region
        $region29: #{tpu_custom_call.1} parent=11 // pred_check
          %p353 = pneg %p211
        $region30: #{tpu_custom_call.1} parent=11 // pred_check_branch
          %355 = sbr.rel (%p353) target = $region32
        $region31: #{tpu_custom_call.1} parent=11 // pred_region
          _
        $region32: #{tpu_custom_call.1} parent=11 // pred_fallthru
          _
      $region12: #{tpu_custom_call.1} parent=5 // pred_fallthru
        _
      %p356 = scmp.lt.s32.totalorder %s28, 2
      // Predicated region
      $region33: #{tpu_custom_call.1} parent=5 // pred_check
        %p357 = pneg %p356
      $region34: #{tpu_custom_call.1} parent=5 // pred_check_branch
        %359 = sbr.rel (%p357) target = $region36
      $region35: #{tpu_custom_call.1} parent=5 // pred_region
        // Predicated region
        $region37: #{tpu_custom_call.1} parent=35 // pred_check
          %p360 = pneg %p48
        $region38: #{tpu_custom_call.1} parent=35 // pred_check_branch
          %362 = sbr.rel (%p360) target = $region40
        $region39: #{tpu_custom_call.1} parent=35 // pred_region
          %s363 = smul.u32 16, %s28
          %p364 = scmp.lt.s32.totalorder %s363, 31
          %s365 = scalar_select %p364, %s363, 31
          %s366 = smul.addr %s365, 8
          %s367 = scalar_lea.vmem %s0, %s366
          %s368 = smul.u32 16, %s28
        $region40: #{tpu_custom_call.1} parent=35 // pred_fallthru
          _
        // Predicated region
        $region41: #{tpu_custom_call.1} parent=35 // pred_check
          %p369 = pneg %p74
        $region42: #{tpu_custom_call.1} parent=35 // pred_check_branch
          %371 = sbr.rel (%p369) target = $region44
        $region43: #{tpu_custom_call.1} parent=35 // pred_region
          %s372 = smul.u32 16, %s28
          %p373 = scmp.lt.s32.totalorder %s372, 31
          %s374 = scalar_select %p373, %s372, 31
          %s375 = smul.addr %s374, 8
          %s376 = scalar_lea.vmem %s1, %s375
          %s377 = smul.u32 16, %s28
        $region44: #{tpu_custom_call.1} parent=35 // pred_fallthru
          _
        // Predicated region
        $region45: #{tpu_custom_call.1} parent=35 // pred_check
          %p378 = pneg %p100
        $region46: #{tpu_custom_call.1} parent=35 // pred_check_branch
          %380 = sbr.rel (%p378) target = $region48
        $region47: #{tpu_custom_call.1} parent=35 // pred_region
          %s381 = smul.u32 16, %s28
          %p382 = scmp.lt.s32.totalorder %s381, 31
          %s383 = scalar_select %p382, %s381, 31
          %s384 = smul.addr %s383, 8
          %s385 = scalar_lea.vmem %s2, %s384
          %s386 = smul.u32 16, %s28
        $region48: #{tpu_custom_call.1} parent=35 // pred_fallthru
          _
      $region36: #{tpu_custom_call.1} parent=5 // pred_fallthru
        _
      %p387 = scmp.le.s32.totalorder 1, %s28
      %p388 = scmp.lt.s32.totalorder %s28, 3
      %p389 = pnand %p387, %p388
      %p390 = pneg %p389
      // Predicated region
      $region49: #{tpu_custom_call.1} parent=5 // pred_check
        _
      $region50: #{tpu_custom_call.1} parent=5 // pred_check_branch
        %392 = sbr.rel (%p389) target = $region52
      $region51: #{tpu_custom_call.1} parent=5 // pred_region
        %s393 = ssub.s32 %s28, 1
        // Predicated region
        $region53: #{tpu_custom_call.1} parent=51 // pred_check
          %p394 = pneg %p127
        $region54: #{tpu_custom_call.1} parent=51 // pred_check_branch
          %396 = sbr.rel (%p394) target = $region56
        $region55: #{tpu_custom_call.1} parent=51 // pred_region
          %398 = dma.done [#allocation3], 2048
        $region56: #{tpu_custom_call.1} parent=51 // pred_fallthru
          _
        %s399 = smul.u32 16, %s33
        %p400 = scmp.lt.s32.totalorder %s399, 31
        %s401 = scalar_select %p400, %s399, 31
        %s402 = smul.addr %s401, 8
        %s403 = scalar_lea.vmem %s0, %s402
        %p404 = pneg %p54
        %p405 = pneg %p51
        %s406 = smul.u32 16, %s33
        %p407 = scmp.lt.s32.totalorder %s406, 31
        %s408 = scalar_select %p407, %s406, 31
        %s409 = smul.addr %s408, 8
        %s410 = scalar_lea.vmem %s1, %s409
        %p411 = pneg %p80
        %p412 = pneg %p77
        %s413 = smul.u32 16, %s33
        %p414 = scmp.lt.s32.totalorder %s413, 31
        %s415 = scalar_select %p414, %s413, 31
        %s416 = smul.addr %s415, 8
        %s417 = scalar_lea.vmem %s2, %s416
        %p418 = pneg %p106
        %p419 = pneg %p103
        %p420 = pneg %p127
        %p421 = pneg %p124
        %p422 = pneg %p148
        %p423 = pneg %p145
        %p424 = pneg %p169
        %p425 = pneg %p166
        %p426 = pneg %p190
        %p427 = pneg %p187
        %p428 = pneg %p211
        %p429 = pneg %p208
        %p430 = pneg %p237
        %p431 = pneg %p234
        %s432 = sand.u32 %s224, 1
        %s433 = scalar_lea.sflag [#allocation4], %s432
        %s434 = sand.u32 %s224, 1
        %s435 = smul.addr %s434, 256
        %s436 = scalar_lea.vmem [#allocation5], %s435
        %p437 = pneg %p263
        %p438 = pneg %p260
        %s439 = sand.u32 %s33, 1
        %s440 = scalar_lea.sflag [#allocation7], %s439
        %s441 = sand.u32 %s250, 1
        %s442 = smul.addr %s441, 256
        %s443 = scalar_lea.vmem [#allocation6], %s442
        %p444 = pneg %p289
        %p445 = pneg %p286
        %s446 = sand.u32 %s33, 1
        %s447 = scalar_lea.sflag [#allocation7], %s446
        %s448 = sand.u32 %s276, 1
        %s449 = smul.addr %s448, 256
        %s450 = scalar_lea.vmem [#allocation8], %s449
        %p451 = pneg %p315
        %p452 = pneg %p312
        %s453 = sand.u32 %s302, 1
        %s454 = scalar_lea.sflag [#allocation10], %s453
        %s455 = sand.u32 %s302, 1
        %s456 = smul.addr %s455, 256
        %s457 = scalar_lea.vmem [#allocation9], %s456
        %s458 = smul.u32 16, %s33
        %p459 = scmp.lt.s32.totalorder %s458, 31
        %s460 = scalar_select %p459, %s458, 31
        %s461 = smul.addr %s460, 8
        %s462 = scalar_lea.vmem %s0, %s461
        %s463 = smul.u32 16, %s33
        %s464 = smul.u32 16, %s33
        %p465 = scmp.lt.s32.totalorder %s464, 31
        %s466 = scalar_select %p465, %s464, 31
        %s467 = smul.addr %s466, 8
        %s468 = scalar_lea.vmem %s1, %s467
        %s469 = smul.u32 16, %s33
        %s470 = smul.u32 16, %s33
        %p471 = scmp.lt.s32.totalorder %s470, 31
        %s472 = scalar_select %p471, %s470, 31
        %s473 = smul.addr %s472, 8
        %s474 = scalar_lea.vmem %s2, %s473
        %s475 = smul.u32 16, %s33
        %s476 = smul.u32 16, %s33
        %s477 = smul.u32 16, %s33
        %s478 = smul.u32 16, %s33
        %s479 = smul.u32 16, %s33
        %v481 = vld [vmem:[%s462] sm:$0xff]
        %v482 = vld [vmem:[%s462 + $0x8] sm:$0xff]
        %v483 = vld [vmem:[%s462 + $0x10] sm:$0xff]
        %v484 = vld [vmem:[%s462 + $0x18] sm:$0xff]
        %v485 = vld [vmem:[%s462 + $0x20] sm:$0xff]
        %v486 = vld [vmem:[%s462 + $0x28] sm:$0xff]
        %v487 = vld [vmem:[%s462 + $0x30] sm:$0xff]
        %v488 = vld [vmem:[%s462 + $0x38] sm:$0xff]
        %v489 = vld [vmem:[%s462 + $0x40] sm:$0xff]
        %v490 = vld [vmem:[%s462 + $0x48] sm:$0xff]
        %v491 = vld [vmem:[%s462 + $0x50] sm:$0xff]
        %v492 = vld [vmem:[%s462 + $0x58] sm:$0xff]
        %v493 = vld [vmem:[%s462 + $0x60] sm:$0xff]
        %v494 = vld [vmem:[%s462 + $0x68] sm:$0xff]
        %v495 = vld [vmem:[%s462 + $0x70] sm:$0xff]
        %v496 = vld [vmem:[%s462 + $0x78] sm:$0xff]
        %v497 = vpack.c.bf16 %v482, %v481
        %v498 = vpack.c.bf16 %v484, %v483
        %v499 = vpack.c.bf16 %v486, %v485
        %v500 = vpack.c.bf16 %v488, %v487
        %v501 = vpack.c.bf16 %v490, %v489
        %v502 = vpack.c.bf16 %v492, %v491
        %v503 = vpack.c.bf16 %v494, %v493
        %v504 = vpack.c.bf16 %v496, %v495
        %v505 = vld [vmem:[#allocation2] sm:$0xff]
        %v506 = vld [vmem:[#allocation2 + $0x8] sm:$0xff]
        %v507 = vld [vmem:[#allocation2 + $0x10] sm:$0xff]
        %v508 = vld [vmem:[#allocation2 + $0x18] sm:$0xff]
        %v509 = vld [vmem:[#allocation2 + $0x20] sm:$0xff]
        %v510 = vld [vmem:[#allocation2 + $0x28] sm:$0xff]
        %v511 = vld [vmem:[#allocation2 + $0x30] sm:$0xff]
        %v512 = vld [vmem:[#allocation2 + $0x38] sm:$0xff]
        %v513 = vld [vmem:[#allocation2 + $0x40] sm:$0xff]
        %v514 = vld [vmem:[#allocation2 + $0x48] sm:$0xff]
        %v515 = vld [vmem:[#allocation2 + $0x50] sm:$0xff]
        %v516 = vld [vmem:[#allocation2 + $0x58] sm:$0xff]
        %v517 = vld [vmem:[#allocation2 + $0x60] sm:$0xff]
        %v518 = vld [vmem:[#allocation2 + $0x68] sm:$0xff]
        %v519 = vld [vmem:[#allocation2 + $0x70] sm:$0xff]
        %v520 = vld [vmem:[#allocation2 + $0x78] sm:$0xff]
        %v521 = vld [vmem:[%s468] sm:$0xff]
        %v522 = vld [vmem:[%s468 + $0x8] sm:$0xff]
        %v523 = vld [vmem:[%s468 + $0x10] sm:$0xff]
        %v524 = vld [vmem:[%s468 + $0x18] sm:$0xff]
        %v525 = vld [vmem:[%s468 + $0x20] sm:$0xff]
        %v526 = vld [vmem:[%s468 + $0x28] sm:$0xff]
        %v527 = vld [vmem:[%s468 + $0x30] sm:$0xff]
        %v528 = vld [vmem:[%s468 + $0x38] sm:$0xff]
        %v529 = vld [vmem:[%s468 + $0x40] sm:$0xff]
        %v530 = vld [vmem:[%s468 + $0x48] sm:$0xff]
        %v531 = vld [vmem:[%s468 + $0x50] sm:$0xff]
        %v532 = vld [vmem:[%s468 + $0x58] sm:$0xff]
        %v533 = vld [vmem:[%s468 + $0x60] sm:$0xff]
        %v534 = vld [vmem:[%s468 + $0x68] sm:$0xff]
        %v535 = vld [vmem:[%s468 + $0x70] sm:$0xff]
        %v536 = vld [vmem:[%s468 + $0x78] sm:$0xff]
        %v537 = vpack.c.bf16 %v522, %v521
        %v538 = vpack.c.bf16 %v524, %v523
        %v539 = vpack.c.bf16 %v526, %v525
        %v540 = vpack.c.bf16 %v528, %v527
        %v541 = vpack.c.bf16 %v530, %v529
        %v542 = vpack.c.bf16 %v532, %v531
        %v543 = vpack.c.bf16 %v534, %v533
        %v544 = vpack.c.bf16 %v536, %v535
        %v545 = vld [vmem:[%s4] sm:$0xff]
        %v547 = vunpack.c.l.b16 %v545
        %v548 = vunpack.c.h.b16 %v545
        %v549 = vpack.c.b16 %v547, %v547
        %v550 = vpack.c.b16 %v548, %v548
        %vm551 = vcmask 64512
        %v553 = vsel %vm551, %v537, 0
        %v556 = vsel %vm551, %v538, 0
        %v559 = vsel %vm551, %v539, 0
        %v562 = vsel %vm551, %v540, 0
        %v565 = vsel %vm551, %v541, 0
        %v568 = vsel %vm551, %v542, 0
        %v571 = vsel %vm551, %v543, 0
        %v574 = vsel %vm551, %v544, 0
        %vm576 = vcmask 1043456
        %v578 = vsel %vm576, %v549, 0
        %v581 = vsel %vm576, %v550, 0
        %583 = vmatpush.bf16.msra.mxu0 0
        %584 = vmatpush.bf16.msra.mxu0 0
        %585 = vmatpush.bf16.msra.mxu0 0
        %586 = vmatpush.bf16.msra.mxu0 0
        %587 = vmatpush.bf16.msra.mxu0 0
        %588 = vmatpush.bf16.msra.mxu0 0
        %589 = vmatpush.bf16.msra.mxu0 0
        %590 = vmatpush.bf16.msra.mxu0 %v578
        %591 = vmatmul.bf16.gmra.mxu0 %v553
        %v592 = vpop.f32.mrf.mxu0
        %v593 = vadd.f32 0.0, %v592
        %v594 = vpop.f32.mrf.mxu0
        %v595 = vadd.f32 0.0, %v594
        %596 = vmatmul.bf16.gmra.mxu0 %v556
        %v597 = vpop.f32.mrf.mxu0
        %v598 = vadd.f32 0.0, %v597
        %v599 = vpop.f32.mrf.mxu0
        %v600 = vadd.f32 0.0, %v599
        %601 = vmatmul.bf16.gmra.mxu0 %v559
        %v602 = vpop.f32.mrf.mxu0
        %v603 = vadd.f32 0.0, %v602
        %v604 = vpop.f32.mrf.mxu0
        %v605 = vadd.f32 0.0, %v604
        %606 = vmatmul.bf16.gmra.mxu0 %v562
        %v607 = vpop.f32.mrf.mxu0
        %v608 = vadd.f32 0.0, %v607
        %v609 = vpop.f32.mrf.mxu0
        %v610 = vadd.f32 0.0, %v609
        %611 = vmatmul.bf16.gmra.mxu0 %v565
        %v612 = vpop.f32.mrf.mxu0
        %v613 = vadd.f32 0.0, %v612
        %v614 = vpop.f32.mrf.mxu0
        %v615 = vadd.f32 0.0, %v614
        %616 = vmatmul.bf16.gmra.mxu0 %v568
        %v617 = vpop.f32.mrf.mxu0
        %v618 = vadd.f32 0.0, %v617
        %v619 = vpop.f32.mrf.mxu0
        %v620 = vadd.f32 0.0, %v619
        %621 = vmatmul.bf16.gmra.mxu0 %v571
        %v622 = vpop.f32.mrf.mxu0
        %v623 = vadd.f32 0.0, %v622
        %v624 = vpop.f32.mrf.mxu0
        %v625 = vadd.f32 0.0, %v624
        %626 = vmatmul.bf16.gmra.mxu0 %v574
        %v627 = vpop.f32.mrf.mxu0
        %v628 = vadd.f32 0.0, %v627
        %v629 = vpop.f32.mrf.mxu0
        %v630 = vadd.f32 0.0, %v629
        %631 = vdwg.mxu0
        %632 = vmatpush.bf16.msra.mxu0 0
        %633 = vmatpush.bf16.msra.mxu0 0
        %634 = vmatpush.bf16.msra.mxu0 0
        %635 = vmatpush.bf16.msra.mxu0 0
        %636 = vmatpush.bf16.msra.mxu0 0
        %637 = vmatpush.bf16.msra.mxu0 0
        %638 = vmatpush.bf16.msra.mxu0 0
        %639 = vmatpush.bf16.msra.mxu0 %v581
        %640 = vmatmul.bf16.gmra.mxu0 %v553
        %v641 = vpop.f32.mrf.mxu0
        %v642 = vadd.f32 0.0, %v641
        %v643 = vpop.f32.mrf.mxu0
        %v644 = vadd.f32 0.0, %v643
        %645 = vmatmul.bf16.gmra.mxu0 %v556
        %v646 = vpop.f32.mrf.mxu0
        %v647 = vadd.f32 0.0, %v646
        %v648 = vpop.f32.mrf.mxu0
        %v649 = vadd.f32 0.0, %v648
        %650 = vmatmul.bf16.gmra.mxu0 %v559
        %v651 = vpop.f32.mrf.mxu0
        %v652 = vadd.f32 0.0, %v651
        %v653 = vpop.f32.mrf.mxu0
        %v654 = vadd.f32 0.0, %v653
        %655 = vmatmul.bf16.gmra.mxu0 %v562
        %v656 = vpop.f32.mrf.mxu0
        %v657 = vadd.f32 0.0, %v656
        %v658 = vpop.f32.mrf.mxu0
        %v659 = vadd.f32 0.0, %v658
        %660 = vmatmul.bf16.gmra.mxu0 %v565
        %v661 = vpop.f32.mrf.mxu0
        %v662 = vadd.f32 0.0, %v661
        %v663 = vpop.f32.mrf.mxu0
        %v664 = vadd.f32 0.0, %v663
        %665 = vmatmul.bf16.gmra.mxu0 %v568
        %v666 = vpop.f32.mrf.mxu0
        %v667 = vadd.f32 0.0, %v666
        %v668 = vpop.f32.mrf.mxu0
        %v669 = vadd.f32 0.0, %v668
        %670 = vmatmul.bf16.gmra.mxu0 %v571
        %v671 = vpop.f32.mrf.mxu0
        %v672 = vadd.f32 0.0, %v671
        %v673 = vpop.f32.mrf.mxu0
        %v674 = vadd.f32 0.0, %v673
        %675 = vmatmul.bf16.gmra.mxu0 %v574
        %v676 = vpop.f32.mrf.mxu0
        %v677 = vadd.f32 0.0, %v676
        %v678 = vpop.f32.mrf.mxu0
        %v679 = vadd.f32 0.0, %v678
        %680 = vdwg.mxu0
        %v697 = vunpack.c.l.b16 %v505
        %v698 = vunpack.c.h.b16 %v505
        %v699 = vunpack.c.l.b16 %v506
        %v700 = vunpack.c.h.b16 %v506
        %v701 = vunpack.c.l.b16 %v507
        %v702 = vunpack.c.h.b16 %v507
        %v703 = vunpack.c.l.b16 %v508
        %v704 = vunpack.c.h.b16 %v508
        %v705 = vunpack.c.l.b16 %v509
        %v706 = vunpack.c.h.b16 %v509
        %v707 = vunpack.c.l.b16 %v510
        %v708 = vunpack.c.h.b16 %v510
        %v709 = vunpack.c.l.b16 %v511
        %v710 = vunpack.c.h.b16 %v511
        %v711 = vunpack.c.l.b16 %v512
        %v712 = vunpack.c.h.b16 %v512
        %v713 = vunpack.c.l.b16 %v513
        %v714 = vunpack.c.h.b16 %v513
        %v715 = vunpack.c.l.b16 %v514
        %v716 = vunpack.c.h.b16 %v514
        %v717 = vunpack.c.l.b16 %v515
        %v718 = vunpack.c.h.b16 %v515
        %v719 = vunpack.c.l.b16 %v516
        %v720 = vunpack.c.h.b16 %v516
        %v721 = vunpack.c.l.b16 %v517
        %v722 = vunpack.c.h.b16 %v517
        %v723 = vunpack.c.l.b16 %v518
        %v724 = vunpack.c.h.b16 %v518
        %v725 = vunpack.c.l.b16 %v519
        %v726 = vunpack.c.h.b16 %v519
        %v727 = vunpack.c.l.b16 %v520
        %v728 = vunpack.c.h.b16 %v520
        %v729 = vpack.c.b16 %v699, %v697
        %v730 = vpack.c.b16 %v700, %v698
        %v731 = vpack.c.b16 %v703, %v701
        %v732 = vpack.c.b16 %v704, %v702
        %v733 = vpack.c.b16 %v707, %v705
        %v734 = vpack.c.b16 %v708, %v706
        %v735 = vpack.c.b16 %v711, %v709
        %v736 = vpack.c.b16 %v712, %v710
        %v737 = vpack.c.b16 %v715, %v713
        %v738 = vpack.c.b16 %v716, %v714
        %v739 = vpack.c.b16 %v719, %v717
        %v740 = vpack.c.b16 %v720, %v718
        %v741 = vpack.c.b16 %v723, %v721
        %v742 = vpack.c.b16 %v724, %v722
        %v743 = vpack.c.b16 %v727, %v725
        %v744 = vpack.c.b16 %v728, %v726
        %761 = vmatpush.bf16.msra.mxu0 %v743
        %762 = vmatpush.bf16.msra.mxu0 %v741
        %763 = vmatpush.bf16.msra.mxu0 %v739
        %764 = vmatpush.bf16.msra.mxu0 %v737
        %765 = vmatpush.bf16.msra.mxu0 %v735
        %766 = vmatpush.bf16.msra.mxu0 %v733
        %767 = vmatpush.bf16.msra.mxu0 %v731
        %768 = vmatpush.bf16.msra.mxu0 %v729
        %769 = vmatmul.bf16.gmra.mxu0 %v497
        %v770 = vpop.f32.mrf.mxu0
        %v771 = vadd.f32 %v593, %v770
        %v772 = vpop.f32.mrf.mxu0
        %v773 = vadd.f32 %v595, %v772
        %774 = vmatmul.bf16.gmra.mxu0 %v498
        %v775 = vpop.f32.mrf.mxu0
        %v776 = vadd.f32 %v598, %v775
        %v777 = vpop.f32.mrf.mxu0
        %v778 = vadd.f32 %v600, %v777
        %779 = vmatmul.bf16.gmra.mxu0 %v499
        %v780 = vpop.f32.mrf.mxu0
        %v781 = vadd.f32 %v603, %v780
        %v782 = vpop.f32.mrf.mxu0
        %v783 = vadd.f32 %v605, %v782
        %784 = vmatmul.bf16.gmra.mxu0 %v500
        %v785 = vpop.f32.mrf.mxu0
        %v786 = vadd.f32 %v608, %v785
        %v787 = vpop.f32.mrf.mxu0
        %v788 = vadd.f32 %v610, %v787
        %789 = vmatmul.bf16.gmra.mxu0 %v501
        %v790 = vpop.f32.mrf.mxu0
        %v791 = vadd.f32 %v613, %v790
        %v792 = vpop.f32.mrf.mxu0
        %v793 = vadd.f32 %v615, %v792
        %794 = vmatmul.bf16.gmra.mxu0 %v502
        %v795 = vpop.f32.mrf.mxu0
        %v796 = vadd.f32 %v618, %v795
        %v797 = vpop.f32.mrf.mxu0
        %v798 = vadd.f32 %v620, %v797
        %799 = vmatmul.bf16.gmra.mxu0 %v503
        %v800 = vpop.f32.mrf.mxu0
        %v801 = vadd.f32 %v623, %v800
        %v802 = vpop.f32.mrf.mxu0
        %v803 = vadd.f32 %v625, %v802
        %804 = vmatmul.bf16.gmra.mxu0 %v504
        %v805 = vpop.f32.mrf.mxu0
        %v806 = vadd.f32 %v628, %v805
        %v807 = vpop.f32.mrf.mxu0
        %v808 = vadd.f32 %v630, %v807
        %809 = vdwg.mxu0
        %810 = vmatpush.bf16.msra.mxu0 %v744
        %811 = vmatpush.bf16.msra.mxu0 %v742
        %812 = vmatpush.bf16.msra.mxu0 %v740
        %813 = vmatpush.bf16.msra.mxu0 %v738
        %814 = vmatpush.bf16.msra.mxu0 %v736
        %815 = vmatpush.bf16.msra.mxu0 %v734
        %816 = vmatpush.bf16.msra.mxu0 %v732
        %817 = vmatpush.bf16.msra.mxu0 %v730
        %818 = vmatmul.bf16.gmra.mxu0 %v497
        %v819 = vpop.f32.mrf.mxu0
        %v820 = vadd.f32 %v642, %v819
        %v821 = vpop.f32.mrf.mxu0
        %v822 = vadd.f32 %v644, %v821
        %823 = vmatmul.bf16.gmra.mxu0 %v498
        %v824 = vpop.f32.mrf.mxu0
        %v825 = vadd.f32 %v647, %v824
        %v826 = vpop.f32.mrf.mxu0
        %v827 = vadd.f32 %v649, %v826
        %828 = vmatmul.bf16.gmra.mxu0 %v499
        %v829 = vpop.f32.mrf.mxu0
        %v830 = vadd.f32 %v652, %v829
        %v831 = vpop.f32.mrf.mxu0
        %v832 = vadd.f32 %v654, %v831
        %833 = vmatmul.bf16.gmra.mxu0 %v500
        %v834 = vpop.f32.mrf.mxu0
        %v835 = vadd.f32 %v657, %v834
        %v836 = vpop.f32.mrf.mxu0
        %v837 = vadd.f32 %v659, %v836
        %838 = vmatmul.bf16.gmra.mxu0 %v501
        %v839 = vpop.f32.mrf.mxu0
        %v840 = vadd.f32 %v662, %v839
        %v841 = vpop.f32.mrf.mxu0
        %v842 = vadd.f32 %v664, %v841
        %843 = vmatmul.bf16.gmra.mxu0 %v502
        %v844 = vpop.f32.mrf.mxu0
        %v845 = vadd.f32 %v667, %v844
        %v846 = vpop.f32.mrf.mxu0
        %v847 = vadd.f32 %v669, %v846
        %848 = vmatmul.bf16.gmra.mxu0 %v503
        %v849 = vpop.f32.mrf.mxu0
        %v850 = vadd.f32 %v672, %v849
        %v851 = vpop.f32.mrf.mxu0
        %v852 = vadd.f32 %v674, %v851
        %853 = vmatmul.bf16.gmra.mxu0 %v504
        %v854 = vpop.f32.mrf.mxu0
        %v855 = vadd.f32 %v677, %v854
        %v856 = vpop.f32.mrf.mxu0
        %v857 = vadd.f32 %v679, %v856
        %858 = vdwg.mxu0
        %v859 = vld [vmem:[%s5] sm:$0x3]
        %v861 = vperm.slane %v859, 0
        %v862 = vperm.slane %v859, 1
        %v865 = vadd.f32 %v771, %v861
        %v866 = vadd.f32 %v820, %v862
        %v867 = vadd.f32 %v773, %v861
        %v868 = vadd.f32 %v822, %v862
        %v869 = vadd.f32 %v776, %v861
        %v870 = vadd.f32 %v825, %v862
        %v871 = vadd.f32 %v778, %v861
        %v872 = vadd.f32 %v827, %v862
        %v873 = vadd.f32 %v781, %v861
        %v874 = vadd.f32 %v830, %v862
        %v875 = vadd.f32 %v783, %v861
        %v876 = vadd.f32 %v832, %v862
        %v877 = vadd.f32 %v786, %v861
        %v878 = vadd.f32 %v835, %v862
        %v879 = vadd.f32 %v788, %v861
        %v880 = vadd.f32 %v837, %v862
        %v881 = vadd.f32 %v791, %v861
        %v882 = vadd.f32 %v840, %v862
        %v883 = vadd.f32 %v793, %v861
        %v884 = vadd.f32 %v842, %v862
        %v885 = vadd.f32 %v796, %v861
        %v886 = vadd.f32 %v845, %v862
        %v887 = vadd.f32 %v798, %v861
        %v888 = vadd.f32 %v847, %v862
        %v889 = vadd.f32 %v801, %v861
        %v890 = vadd.f32 %v850, %v862
        %v891 = vadd.f32 %v803, %v861
        %v892 = vadd.f32 %v852, %v862
        %v893 = vadd.f32 %v806, %v861
        %v894 = vadd.f32 %v855, %v862
        %v895 = vadd.f32 %v808, %v861
        %v896 = vadd.f32 %v857, %v862
        %v897 = vmax.f32 %v865, 0.0
        %v898 = vmax.f32 %v866, 0.0
        %v899 = vmax.f32 %v867, 0.0
        %v900 = vmax.f32 %v868, 0.0
        %v901 = vmax.f32 %v869, 0.0
        %v902 = vmax.f32 %v870, 0.0
        %v903 = vmax.f32 %v871, 0.0
        %v904 = vmax.f32 %v872, 0.0
        %v905 = vmax.f32 %v873, 0.0
        %v906 = vmax.f32 %v874, 0.0
        %v907 = vmax.f32 %v875, 0.0
        %v908 = vmax.f32 %v876, 0.0
        %v909 = vmax.f32 %v877, 0.0
        %v910 = vmax.f32 %v878, 0.0
        %v911 = vmax.f32 %v879, 0.0
        %v912 = vmax.f32 %v880, 0.0
        %v913 = vmax.f32 %v881, 0.0
        %v914 = vmax.f32 %v882, 0.0
        %v915 = vmax.f32 %v883, 0.0
        %v916 = vmax.f32 %v884, 0.0
        %v917 = vmax.f32 %v885, 0.0
        %v918 = vmax.f32 %v886, 0.0
        %v919 = vmax.f32 %v887, 0.0
        %v920 = vmax.f32 %v888, 0.0
        %v921 = vmax.f32 %v889, 0.0
        %v922 = vmax.f32 %v890, 0.0
        %v923 = vmax.f32 %v891, 0.0
        %v924 = vmax.f32 %v892, 0.0
        %v925 = vmax.f32 %v893, 0.0
        %v926 = vmax.f32 %v894, 0.0
        %v927 = vmax.f32 %v895, 0.0
        %v928 = vmax.f32 %v896, 0.0
        %v929 = vmax.f32 %v897, %v898
        %930 = vmax.xlane.f32.xlu0 %v929
        %v931 = vpop.xlane.xlu0 %930
        %v932 = vmax.f32 %v899, %v900
        %933 = vmax.xlane.f32.xlu0 %v932
        %v934 = vpop.xlane.xlu0 %933
        %v935 = vmax.f32 %v901, %v902
        %936 = vmax.xlane.f32.xlu0 %v935
        %v937 = vpop.xlane.xlu0 %936
        %v938 = vmax.f32 %v903, %v904
        %939 = vmax.xlane.f32.xlu0 %v938
        %v940 = vpop.xlane.xlu0 %939
        %v941 = vmax.f32 %v905, %v906
        %942 = vmax.xlane.f32.xlu0 %v941
        %v943 = vpop.xlane.xlu0 %942
        %v944 = vmax.f32 %v907, %v908
        %945 = vmax.xlane.f32.xlu0 %v944
        %v946 = vpop.xlane.xlu0 %945
        %v947 = vmax.f32 %v909, %v910
        %948 = vmax.xlane.f32.xlu0 %v947
        %v949 = vpop.xlane.xlu0 %948
        %v950 = vmax.f32 %v911, %v912
        %951 = vmax.xlane.f32.xlu0 %v950
        %v952 = vpop.xlane.xlu0 %951
        %v953 = vmax.f32 %v913, %v914
        %954 = vmax.xlane.f32.xlu0 %v953
        %v955 = vpop.xlane.xlu0 %954
        %v956 = vmax.f32 %v915, %v916
        %957 = vmax.xlane.f32.xlu0 %v956
        %v958 = vpop.xlane.xlu0 %957
        %v959 = vmax.f32 %v917, %v918
        %960 = vmax.xlane.f32.xlu0 %v959
        %v961 = vpop.xlane.xlu0 %960
        %v962 = vmax.f32 %v919, %v920
        %963 = vmax.xlane.f32.xlu0 %v962
        %v964 = vpop.xlane.xlu0 %963
        %v965 = vmax.f32 %v921, %v922
        %966 = vmax.xlane.f32.xlu0 %v965
        %v967 = vpop.xlane.xlu0 %966
        %v968 = vmax.f32 %v923, %v924
        %969 = vmax.xlane.f32.xlu0 %v968
        %v970 = vpop.xlane.xlu0 %969
        %v971 = vmax.f32 %v925, %v926
        %972 = vmax.xlane.f32.xlu0 %v971
        %v973 = vpop.xlane.xlu0 %972
        %v974 = vmax.f32 %v927, %v928
        %975 = vmax.xlane.f32.xlu0 %v974
        %v976 = vpop.xlane.xlu0 %975
        %v977 = vsub.f32 %v897, %v931
        %v978 = vsub.f32 %v898, %v931
        %v979 = vsub.f32 %v899, %v934
        %v980 = vsub.f32 %v900, %v934
        %v981 = vsub.f32 %v901, %v937
        %v982 = vsub.f32 %v902, %v937
        %v983 = vsub.f32 %v903, %v940
        %v984 = vsub.f32 %v904, %v940
        %v985 = vsub.f32 %v905, %v943
        %v986 = vsub.f32 %v906, %v943
        %v987 = vsub.f32 %v907, %v946
        %v988 = vsub.f32 %v908, %v946
        %v989 = vsub.f32 %v909, %v949
        %v990 = vsub.f32 %v910, %v949
        %v991 = vsub.f32 %v911, %v952
        %v992 = vsub.f32 %v912, %v952
        %v993 = vsub.f32 %v913, %v955
        %v994 = vsub.f32 %v914, %v955
        %v995 = vsub.f32 %v915, %v958
        %v996 = vsub.f32 %v916, %v958
        %v997 = vsub.f32 %v917, %v961
        %v998 = vsub.f32 %v918, %v961
        %v999 = vsub.f32 %v919, %v964
        %v1000 = vsub.f32 %v920, %v964
        %v1001 = vsub.f32 %v921, %v967
        %v1002 = vsub.f32 %v922, %v967
        %v1003 = vsub.f32 %v923, %v970
        %v1004 = vsub.f32 %v924, %v970
        %v1005 = vsub.f32 %v925, %v973
        %v1006 = vsub.f32 %v926, %v973
        %v1007 = vsub.f32 %v927, %v976
        %v1008 = vsub.f32 %v928, %v976
        %v1009 = vmul.f32 %v977, 1.442695
        %v1010 = vpow.pop %v1009
        %v1011 = vmul.f32 %v978, 1.442695
        %v1012 = vpow.pop %v1011
        %v1013 = vmul.f32 %v979, 1.442695
        %v1014 = vpow.pop %v1013
        %v1015 = vmul.f32 %v980, 1.442695
        %v1016 = vpow.pop %v1015
        %v1017 = vmul.f32 %v981, 1.442695
        %v1018 = vpow.pop %v1017
        %v1019 = vmul.f32 %v982, 1.442695
        %v1020 = vpow.pop %v1019
        %v1021 = vmul.f32 %v983, 1.442695
        %v1022 = vpow.pop %v1021
        %v1023 = vmul.f32 %v984, 1.442695
        %v1024 = vpow.pop %v1023
        %v1025 = vmul.f32 %v985, 1.442695
        %v1026 = vpow.pop %v1025
        %v1027 = vmul.f32 %v986, 1.442695
        %v1028 = vpow.pop %v1027
        %v1029 = vmul.f32 %v987, 1.442695
        %v1030 = vpow.pop %v1029
        %v1031 = vmul.f32 %v988, 1.442695
        %v1032 = vpow.pop %v1031
        %v1033 = vmul.f32 %v989, 1.442695
        %v1034 = vpow.pop %v1033
        %v1035 = vmul.f32 %v990, 1.442695
        %v1036 = vpow.pop %v1035
        %v1037 = vmul.f32 %v991, 1.442695
        %v1038 = vpow.pop %v1037
        %v1039 = vmul.f32 %v992, 1.442695
        %v1040 = vpow.pop %v1039
        %v1041 = vmul.f32 %v993, 1.442695
        %v1042 = vpow.pop %v1041
        %v1043 = vmul.f32 %v994, 1.442695
        %v1044 = vpow.pop %v1043
        %v1045 = vmul.f32 %v995, 1.442695
        %v1046 = vpow.pop %v1045
        %v1047 = vmul.f32 %v996, 1.442695
        %v1048 = vpow.pop %v1047
        %v1049 = vmul.f32 %v997, 1.442695
        %v1050 = vpow.pop %v1049
        %v1051 = vmul.f32 %v998, 1.442695
        %v1052 = vpow.pop %v1051
        %v1053 = vmul.f32 %v999, 1.442695
        %v1054 = vpow.pop %v1053
        %v1055 = vmul.f32 %v1000, 1.442695
        %v1056 = vpow.pop %v1055
        %v1057 = vmul.f32 %v1001, 1.442695
        %v1058 = vpow.pop %v1057
        %v1059 = vmul.f32 %v1002, 1.442695
        %v1060 = vpow.pop %v1059
        %v1061 = vmul.f32 %v1003, 1.442695
        %v1062 = vpow.pop %v1061
        %v1063 = vmul.f32 %v1004, 1.442695
        %v1064 = vpow.pop %v1063
        %v1065 = vmul.f32 %v1005, 1.442695
        %v1066 = vpow.pop %v1065
        %v1067 = vmul.f32 %v1006, 1.442695
        %v1068 = vpow.pop %v1067
        %v1069 = vmul.f32 %v1007, 1.442695
        %v1070 = vpow.pop %v1069
        %v1071 = vmul.f32 %v1008, 1.442695
        %v1072 = vpow.pop %v1071
        %v1073 = vmul.f32 %v931, 1.442695
        %v1074 = vpow.pop %v1073
        %v1075 = vmul.f32 %v934, 1.442695
        %v1076 = vpow.pop %v1075
        %v1077 = vmul.f32 %v937, 1.442695
        %v1078 = vpow.pop %v1077
        %v1079 = vmul.f32 %v940, 1.442695
        %v1080 = vpow.pop %v1079
        %v1081 = vmul.f32 %v943, 1.442695
        %v1082 = vpow.pop %v1081
        %v1083 = vmul.f32 %v946, 1.442695
        %v1084 = vpow.pop %v1083
        %v1085 = vmul.f32 %v949, 1.442695
        %v1086 = vpow.pop %v1085
        %v1087 = vmul.f32 %v952, 1.442695
        %v1088 = vpow.pop %v1087
        %v1089 = vmul.f32 %v955, 1.442695
        %v1090 = vpow.pop %v1089
        %v1091 = vmul.f32 %v958, 1.442695
        %v1092 = vpow.pop %v1091
        %v1093 = vmul.f32 %v961, 1.442695
        %v1094 = vpow.pop %v1093
        %v1095 = vmul.f32 %v964, 1.442695
        %v1096 = vpow.pop %v1095
        %v1097 = vmul.f32 %v967, 1.442695
        %v1098 = vpow.pop %v1097
        %v1099 = vmul.f32 %v970, 1.442695
        %v1100 = vpow.pop %v1099
        %v1101 = vmul.f32 %v973, 1.442695
        %v1102 = vpow.pop %v1101
        %v1103 = vmul.f32 %v976, 1.442695
        %v1104 = vpow.pop %v1103
        %v1105 = vmul.f32 %v1010, %v1074
        %v1106 = vmul.f32 %v1012, %v1074
        %v1107 = vmul.f32 %v1014, %v1076
        %v1108 = vmul.f32 %v1016, %v1076
        %v1109 = vmul.f32 %v1018, %v1078
        %v1110 = vmul.f32 %v1020, %v1078
        %v1111 = vmul.f32 %v1022, %v1080
        %v1112 = vmul.f32 %v1024, %v1080
        %v1113 = vmul.f32 %v1026, %v1082
        %v1114 = vmul.f32 %v1028, %v1082
        %v1115 = vmul.f32 %v1030, %v1084
        %v1116 = vmul.f32 %v1032, %v1084
        %v1117 = vmul.f32 %v1034, %v1086
        %v1118 = vmul.f32 %v1036, %v1086
        %v1119 = vmul.f32 %v1038, %v1088
        %v1120 = vmul.f32 %v1040, %v1088
        %v1121 = vmul.f32 %v1042, %v1090
        %v1122 = vmul.f32 %v1044, %v1090
        %v1123 = vmul.f32 %v1046, %v1092
        %v1124 = vmul.f32 %v1048, %v1092
        %v1125 = vmul.f32 %v1050, %v1094
        %v1126 = vmul.f32 %v1052, %v1094
        %v1127 = vmul.f32 %v1054, %v1096
        %v1128 = vmul.f32 %v1056, %v1096
        %v1129 = vmul.f32 %v1058, %v1098
        %v1130 = vmul.f32 %v1060, %v1098
        %v1131 = vmul.f32 %v1062, %v1100
        %v1132 = vmul.f32 %v1064, %v1100
        %v1133 = vmul.f32 %v1066, %v1102
        %v1134 = vmul.f32 %v1068, %v1102
        %v1135 = vmul.f32 %v1070, %v1104
        %v1136 = vmul.f32 %v1072, %v1104
        %v1137 = vlaneseq
        %v1138 = vand.u32 %v1137, 127
        %v1139 = vadd.s32 %v1138, 128
        %vm1140 = vcmp.lt.s32.totalorder %v1138, 200
        %vm1141 = vcmp.lt.s32.totalorder %v1139, 200
        %v1142 = vsel %vm1140, %v1010, 0.0
        %v1143 = vsel %vm1141, %v1012, 0.0
        %v1144 = vsel %vm1140, %v1014, 0.0
        %v1145 = vsel %vm1141, %v1016, 0.0
        %v1146 = vsel %vm1140, %v1018, 0.0
        %v1147 = vsel %vm1141, %v1020, 0.0
        %v1148 = vsel %vm1140, %v1022, 0.0
        %v1149 = vsel %vm1141, %v1024, 0.0
        %v1150 = vsel %vm1140, %v1026, 0.0
        %v1151 = vsel %vm1141, %v1028, 0.0
        %v1152 = vsel %vm1140, %v1030, 0.0
        %v1153 = vsel %vm1141, %v1032, 0.0
        %v1154 = vsel %vm1140, %v1034, 0.0
        %v1155 = vsel %vm1141, %v1036, 0.0
        %v1156 = vsel %vm1140, %v1038, 0.0
        %v1157 = vsel %vm1141, %v1040, 0.0
        %v1158 = vsel %vm1140, %v1042, 0.0
        %v1159 = vsel %vm1141, %v1044, 0.0
        %v1160 = vsel %vm1140, %v1046, 0.0
        %v1161 = vsel %vm1141, %v1048, 0.0
        %v1162 = vsel %vm1140, %v1050, 0.0
        %v1163 = vsel %vm1141, %v1052, 0.0
        %v1164 = vsel %vm1140, %v1054, 0.0
        %v1165 = vsel %vm1141, %v1056, 0.0
        %v1166 = vsel %vm1140, %v1058, 0.0
        %v1167 = vsel %vm1141, %v1060, 0.0
        %v1168 = vsel %vm1140, %v1062, 0.0
        %v1169 = vsel %vm1141, %v1064, 0.0
        %v1170 = vsel %vm1140, %v1066, 0.0
        %v1171 = vsel %vm1141, %v1068, 0.0
        %v1172 = vsel %vm1140, %v1070, 0.0
        %v1173 = vsel %vm1141, %v1072, 0.0
        %v1174 = vadd.f32 %v1142, %v1143
        %1175 = vadd.xlane.f32.xlu0 %v1174
        %v1176 = vpop.xlane.xlu0 %1175
        %v1177 = vadd.f32 %v1144, %v1145
        %1178 = vadd.xlane.f32.xlu0 %v1177
        %v1179 = vpop.xlane.xlu0 %1178
        %v1180 = vadd.f32 %v1146, %v1147
        %1181 = vadd.xlane.f32.xlu0 %v1180
        %v1182 = vpop.xlane.xlu0 %1181
        %v1183 = vadd.f32 %v1148, %v1149
        %1184 = vadd.xlane.f32.xlu0 %v1183
        %v1185 = vpop.xlane.xlu0 %1184
        %v1186 = vadd.f32 %v1150, %v1151
        %1187 = vadd.xlane.f32.xlu0 %v1186
        %v1188 = vpop.xlane.xlu0 %1187
        %v1189 = vadd.f32 %v1152, %v1153
        %1190 = vadd.xlane.f32.xlu0 %v1189
        %v1191 = vpop.xlane.xlu0 %1190
        %v1192 = vadd.f32 %v1154, %v1155
        %1193 = vadd.xlane.f32.xlu0 %v1192
        %v1194 = vpop.xlane.xlu0 %1193
        %v1195 = vadd.f32 %v1156, %v1157
        %1196 = vadd.xlane.f32.xlu0 %v1195
        %v1197 = vpop.xlane.xlu0 %1196
        %v1198 = vadd.f32 %v1158, %v1159
        %1199 = vadd.xlane.f32.xlu0 %v1198
        %v1200 = vpop.xlane.xlu0 %1199
        %v1201 = vadd.f32 %v1160, %v1161
        %1202 = vadd.xlane.f32.xlu0 %v1201
        %v1203 = vpop.xlane.xlu0 %1202
        %v1204 = vadd.f32 %v1162, %v1163
        %1205 = vadd.xlane.f32.xlu0 %v1204
        %v1206 = vpop.xlane.xlu0 %1205
        %v1207 = vadd.f32 %v1164, %v1165
        %1208 = vadd.xlane.f32.xlu0 %v1207
        %v1209 = vpop.xlane.xlu0 %1208
        %v1210 = vadd.f32 %v1166, %v1167
        %1211 = vadd.xlane.f32.xlu0 %v1210
        %v1212 = vpop.xlane.xlu0 %1211
        %v1213 = vadd.f32 %v1168, %v1169
        %1214 = vadd.xlane.f32.xlu0 %v1213
        %v1215 = vpop.xlane.xlu0 %1214
        %v1216 = vadd.f32 %v1170, %v1171
        %1217 = vadd.xlane.f32.xlu0 %v1216
        %v1218 = vpop.xlane.xlu0 %1217
        %v1219 = vadd.f32 %v1172, %v1173
        %1220 = vadd.xlane.f32.xlu0 %v1219
        %v1221 = vpop.xlane.xlu0 %1220
        %v1222 = vrcp.pop %v1176
        %v1223 = vmul.f32 %v1176, %v1222
        %v1224 = vsub.f32 1.0, %v1223
        %v1225 = vmul.f32 %v1222, %v1224
        %v1226 = vadd.f32 %v1222, %v1225
        %vm1227 = vweird.f32 %v1176
        %vm1228 = vweird.f32 %v1222
        %vm1229 = vmor %vm1227, %vm1228
        %v1230 = vsel %vm1229, %v1222, %v1226
        %v1231 = vand.u32 2147483647, %v1176
        %vm1232 = vcmp.eq.f32.partialorder %v1231, 8.507059e+37
        %v1233 = vand.u32 %v1176, 2147483648
        %v1234 = vor.u32 1.1754944e-38, %v1233
        %v1235 = vsel %vm1232, %v1234, %v1230
        %v1236 = vrcp.pop %v1179
        %v1237 = vmul.f32 %v1179, %v1236
        %v1238 = vsub.f32 1.0, %v1237
        %v1239 = vmul.f32 %v1236, %v1238
        %v1240 = vadd.f32 %v1236, %v1239
        %vm1241 = vweird.f32 %v1179
        %vm1242 = vweird.f32 %v1236
        %vm1243 = vmor %vm1241, %vm1242
        %v1244 = vsel %vm1243, %v1236, %v1240
        %v1245 = vand.u32 2147483647, %v1179
        %vm1246 = vcmp.eq.f32.partialorder %v1245, 8.507059e+37
        %v1247 = vand.u32 %v1179, 2147483648
        %v1248 = vor.u32 1.1754944e-38, %v1247
        %v1249 = vsel %vm1246, %v1248, %v1244
        %v1250 = vrcp.pop %v1182
        %v1251 = vmul.f32 %v1182, %v1250
        %v1252 = vsub.f32 1.0, %v1251
        %v1253 = vmul.f32 %v1250, %v1252
        %v1254 = vadd.f32 %v1250, %v1253
        %vm1255 = vweird.f32 %v1182
        %vm1256 = vweird.f32 %v1250
        %vm1257 = vmor %vm1255, %vm1256
        %v1258 = vsel %vm1257, %v1250, %v1254
        %v1259 = vand.u32 2147483647, %v1182
        %vm1260 = vcmp.eq.f32.partialorder %v1259, 8.507059e+37
        %v1261 = vand.u32 %v1182, 2147483648
        %v1262 = vor.u32 1.1754944e-38, %v1261
        %v1263 = vsel %vm1260, %v1262, %v1258
        %v1264 = vrcp.pop %v1185
        %v1265 = vmul.f32 %v1185, %v1264
        %v1266 = vsub.f32 1.0, %v1265
        %v1267 = vmul.f32 %v1264, %v1266
        %v1268 = vadd.f32 %v1264, %v1267
        %vm1269 = vweird.f32 %v1185
        %vm1270 = vweird.f32 %v1264
        %vm1271 = vmor %vm1269, %vm1270
        %v1272 = vsel %vm1271, %v1264, %v1268
        %v1273 = vand.u32 2147483647, %v1185
        %vm1274 = vcmp.eq.f32.partialorder %v1273, 8.507059e+37
        %v1275 = vand.u32 %v1185, 2147483648
        %v1276 = vor.u32 1.1754944e-38, %v1275
        %v1277 = vsel %vm1274, %v1276, %v1272
        %v1278 = vrcp.pop %v1188
        %v1279 = vmul.f32 %v1188, %v1278
        %v1280 = vsub.f32 1.0, %v1279
        %v1281 = vmul.f32 %v1278, %v1280
        %v1282 = vadd.f32 %v1278, %v1281
        %vm1283 = vweird.f32 %v1188
        %vm1284 = vweird.f32 %v1278
        %vm1285 = vmor %vm1283, %vm1284
        %v1286 = vsel %vm1285, %v1278, %v1282
        %v1287 = vand.u32 2147483647, %v1188
        %vm1288 = vcmp.eq.f32.partialorder %v1287, 8.507059e+37
        %v1289 = vand.u32 %v1188, 2147483648
        %v1290 = vor.u32 1.1754944e-38, %v1289
        %v1291 = vsel %vm1288, %v1290, %v1286
        %v1292 = vrcp.pop %v1191
        %v1293 = vmul.f32 %v1191, %v1292
        %v1294 = vsub.f32 1.0, %v1293
        %v1295 = vmul.f32 %v1292, %v1294
        %v1296 = vadd.f32 %v1292, %v1295
        %vm1297 = vweird.f32 %v1191
        %vm1298 = vweird.f32 %v1292
        %vm1299 = vmor %vm1297, %vm1298
        %v1300 = vsel %vm1299, %v1292, %v1296
        %v1301 = vand.u32 2147483647, %v1191
        %vm1302 = vcmp.eq.f32.partialorder %v1301, 8.507059e+37
        %v1303 = vand.u32 %v1191, 2147483648
        %v1304 = vor.u32 1.1754944e-38, %v1303
        %v1305 = vsel %vm1302, %v1304, %v1300
        %v1306 = vrcp.pop %v1194
        %v1307 = vmul.f32 %v1194, %v1306
        %v1308 = vsub.f32 1.0, %v1307
        %v1309 = vmul.f32 %v1306, %v1308
        %v1310 = vadd.f32 %v1306, %v1309
        %vm1311 = vweird.f32 %v1194
        %vm1312 = vweird.f32 %v1306
        %vm1313 = vmor %vm1311, %vm1312
        %v1314 = vsel %vm1313, %v1306, %v1310
        %v1315 = vand.u32 2147483647, %v1194
        %vm1316 = vcmp.eq.f32.partialorder %v1315, 8.507059e+37
        %v1317 = vand.u32 %v1194, 2147483648
        %v1318 = vor.u32 1.1754944e-38, %v1317
        %v1319 = vsel %vm1316, %v1318, %v1314
        %v1320 = vrcp.pop %v1197
        %v1321 = vmul.f32 %v1197, %v1320
        %v1322 = vsub.f32 1.0, %v1321
        %v1323 = vmul.f32 %v1320, %v1322
        %v1324 = vadd.f32 %v1320, %v1323
        %vm1325 = vweird.f32 %v1197
        %vm1326 = vweird.f32 %v1320
        %vm1327 = vmor %vm1325, %vm1326
        %v1328 = vsel %vm1327, %v1320, %v1324
        %v1329 = vand.u32 2147483647, %v1197
        %vm1330 = vcmp.eq.f32.partialorder %v1329, 8.507059e+37
        %v1331 = vand.u32 %v1197, 2147483648
        %v1332 = vor.u32 1.1754944e-38, %v1331
        %v1333 = vsel %vm1330, %v1332, %v1328
        %v1334 = vrcp.pop %v1200
        %v1335 = vmul.f32 %v1200, %v1334
        %v1336 = vsub.f32 1.0, %v1335
        %v1337 = vmul.f32 %v1334, %v1336
        %v1338 = vadd.f32 %v1334, %v1337
        %vm1339 = vweird.f32 %v1200
        %vm1340 = vweird.f32 %v1334
        %vm1341 = vmor %vm1339, %vm1340
        %v1342 = vsel %vm1341, %v1334, %v1338
        %v1343 = vand.u32 2147483647, %v1200
        %vm1344 = vcmp.eq.f32.partialorder %v1343, 8.507059e+37
        %v1345 = vand.u32 %v1200, 2147483648
        %v1346 = vor.u32 1.1754944e-38, %v1345
        %v1347 = vsel %vm1344, %v1346, %v1342
        %v1348 = vrcp.pop %v1203
        %v1349 = vmul.f32 %v1203, %v1348
        %v1350 = vsub.f32 1.0, %v1349
        %v1351 = vmul.f32 %v1348, %v1350
        %v1352 = vadd.f32 %v1348, %v1351
        %vm1353 = vweird.f32 %v1203
        %vm1354 = vweird.f32 %v1348
        %vm1355 = vmor %vm1353, %vm1354
        %v1356 = vsel %vm1355, %v1348, %v1352
        %v1357 = vand.u32 2147483647, %v1203
        %vm1358 = vcmp.eq.f32.partialorder %v1357, 8.507059e+37
        %v1359 = vand.u32 %v1203, 2147483648
        %v1360 = vor.u32 1.1754944e-38, %v1359
        %v1361 = vsel %vm1358, %v1360, %v1356
        %v1362 = vrcp.pop %v1206
        %v1363 = vmul.f32 %v1206, %v1362
        %v1364 = vsub.f32 1.0, %v1363
        %v1365 = vmul.f32 %v1362, %v1364
        %v1366 = vadd.f32 %v1362, %v1365
        %vm1367 = vweird.f32 %v1206
        %vm1368 = vweird.f32 %v1362
        %vm1369 = vmor %vm1367, %vm1368
        %v1370 = vsel %vm1369, %v1362, %v1366
        %v1371 = vand.u32 2147483647, %v1206
        %vm1372 = vcmp.eq.f32.partialorder %v1371, 8.507059e+37
        %v1373 = vand.u32 %v1206, 2147483648
        %v1374 = vor.u32 1.1754944e-38, %v1373
        %v1375 = vsel %vm1372, %v1374, %v1370
        %v1376 = vrcp.pop %v1209
        %v1377 = vmul.f32 %v1209, %v1376
        %v1378 = vsub.f32 1.0, %v1377
        %v1379 = vmul.f32 %v1376, %v1378
        %v1380 = vadd.f32 %v1376, %v1379
        %vm1381 = vweird.f32 %v1209
        %vm1382 = vweird.f32 %v1376
        %vm1383 = vmor %vm1381, %vm1382
        %v1384 = vsel %vm1383, %v1376, %v1380
        %v1385 = vand.u32 2147483647, %v1209
        %vm1386 = vcmp.eq.f32.partialorder %v1385, 8.507059e+37
        %v1387 = vand.u32 %v1209, 2147483648
        %v1388 = vor.u32 1.1754944e-38, %v1387
        %v1389 = vsel %vm1386, %v1388, %v1384
        %v1390 = vrcp.pop %v1212
        %v1391 = vmul.f32 %v1212, %v1390
        %v1392 = vsub.f32 1.0, %v1391
        %v1393 = vmul.f32 %v1390, %v1392
        %v1394 = vadd.f32 %v1390, %v1393
        %vm1395 = vweird.f32 %v1212
        %vm1396 = vweird.f32 %v1390
        %vm1397 = vmor %vm1395, %vm1396
        %v1398 = vsel %vm1397, %v1390, %v1394
        %v1399 = vand.u32 2147483647, %v1212
        %vm1400 = vcmp.eq.f32.partialorder %v1399, 8.507059e+37
        %v1401 = vand.u32 %v1212, 2147483648
        %v1402 = vor.u32 1.1754944e-38, %v1401
        %v1403 = vsel %vm1400, %v1402, %v1398
        %v1404 = vrcp.pop %v1215
        %v1405 = vmul.f32 %v1215, %v1404
        %v1406 = vsub.f32 1.0, %v1405
        %v1407 = vmul.f32 %v1404, %v1406
        %v1408 = vadd.f32 %v1404, %v1407
        %vm1409 = vweird.f32 %v1215
        %vm1410 = vweird.f32 %v1404
        %vm1411 = vmor %vm1409, %vm1410
        %v1412 = vsel %vm1411, %v1404, %v1408
        %v1413 = vand.u32 2147483647, %v1215
        %vm1414 = vcmp.eq.f32.partialorder %v1413, 8.507059e+37
        %v1415 = vand.u32 %v1215, 2147483648
        %v1416 = vor.u32 1.1754944e-38, %v1415
        %v1417 = vsel %vm1414, %v1416, %v1412
        %v1418 = vrcp.pop %v1218
        %v1419 = vmul.f32 %v1218, %v1418
        %v1420 = vsub.f32 1.0, %v1419
        %v1421 = vmul.f32 %v1418, %v1420
        %v1422 = vadd.f32 %v1418, %v1421
        %vm1423 = vweird.f32 %v1218
        %vm1424 = vweird.f32 %v1418
        %vm1425 = vmor %vm1423, %vm1424
        %v1426 = vsel %vm1425, %v1418, %v1422
        %v1427 = vand.u32 2147483647, %v1218
        %vm1428 = vcmp.eq.f32.partialorder %v1427, 8.507059e+37
        %v1429 = vand.u32 %v1218, 2147483648
        %v1430 = vor.u32 1.1754944e-38, %v1429
        %v1431 = vsel %vm1428, %v1430, %v1426
        %v1432 = vrcp.pop %v1221
        %v1433 = vmul.f32 %v1221, %v1432
        %v1434 = vsub.f32 1.0, %v1433
        %v1435 = vmul.f32 %v1432, %v1434
        %v1436 = vadd.f32 %v1432, %v1435
        %vm1437 = vweird.f32 %v1221
        %vm1438 = vweird.f32 %v1432
        %vm1439 = vmor %vm1437, %vm1438
        %v1440 = vsel %vm1439, %v1432, %v1436
        %v1441 = vand.u32 2147483647, %v1221
        %vm1442 = vcmp.eq.f32.partialorder %v1441, 8.507059e+37
        %v1443 = vand.u32 %v1221, 2147483648
        %v1444 = vor.u32 1.1754944e-38, %v1443
        %v1445 = vsel %vm1442, %v1444, %v1440
        %v1446 = vmul.f32 %v1142, %v1235
        %v1447 = vmul.f32 %v1143, %v1235
        %v1448 = vmul.f32 %v1144, %v1249
        %v1449 = vmul.f32 %v1145, %v1249
        %v1450 = vmul.f32 %v1146, %v1263
        %v1451 = vmul.f32 %v1147, %v1263
        %v1452 = vmul.f32 %v1148, %v1277
        %v1453 = vmul.f32 %v1149, %v1277
        %v1454 = vmul.f32 %v1150, %v1291
        %v1455 = vmul.f32 %v1151, %v1291
        %v1456 = vmul.f32 %v1152, %v1305
        %v1457 = vmul.f32 %v1153, %v1305
        %v1458 = vmul.f32 %v1154, %v1319
        %v1459 = vmul.f32 %v1155, %v1319
        %v1460 = vmul.f32 %v1156, %v1333
        %v1461 = vmul.f32 %v1157, %v1333
        %v1462 = vmul.f32 %v1158, %v1347
        %v1463 = vmul.f32 %v1159, %v1347
        %v1464 = vmul.f32 %v1160, %v1361
        %v1465 = vmul.f32 %v1161, %v1361
        %v1466 = vmul.f32 %v1162, %v1375
        %v1467 = vmul.f32 %v1163, %v1375
        %v1468 = vmul.f32 %v1164, %v1389
        %v1469 = vmul.f32 %v1165, %v1389
        %v1470 = vmul.f32 %v1166, %v1403
        %v1471 = vmul.f32 %v1167, %v1403
        %v1472 = vmul.f32 %v1168, %v1417
        %v1473 = vmul.f32 %v1169, %v1417
        %v1474 = vmul.f32 %v1170, %v1431
        %v1475 = vmul.f32 %v1171, %v1431
        %v1476 = vmul.f32 %v1172, %v1445
        %v1477 = vmul.f32 %v1173, %v1445
        %v1478 = vld [vmem:[%s474] sm:$0xff]
        %v1479 = vld [vmem:[%s474 + $0x8] sm:$0xff]
        %v1480 = vld [vmem:[%s474 + $0x10] sm:$0xff]
        %v1481 = vld [vmem:[%s474 + $0x18] sm:$0xff]
        %v1482 = vld [vmem:[%s474 + $0x20] sm:$0xff]
        %v1483 = vld [vmem:[%s474 + $0x28] sm:$0xff]
        %v1484 = vld [vmem:[%s474 + $0x30] sm:$0xff]
        %v1485 = vld [vmem:[%s474 + $0x38] sm:$0xff]
        %v1486 = vld [vmem:[%s474 + $0x40] sm:$0xff]
        %v1487 = vld [vmem:[%s474 + $0x48] sm:$0xff]
        %v1488 = vld [vmem:[%s474 + $0x50] sm:$0xff]
        %v1489 = vld [vmem:[%s474 + $0x58] sm:$0xff]
        %v1490 = vld [vmem:[%s474 + $0x60] sm:$0xff]
        %v1491 = vld [vmem:[%s474 + $0x68] sm:$0xff]
        %v1492 = vld [vmem:[%s474 + $0x70] sm:$0xff]
        %v1493 = vld [vmem:[%s474 + $0x78] sm:$0xff]
        %1495 = vset.pattern.permute.xlu0 0
        %1496 = vperm.xlu0 %1495, %v1478
        %v1497 = vpop.permute.xlu0 %1496
        %1500 = vset.pattern.permute.xlu0 0
        %1501 = vperm.xlu0 %1500, %v1479
        %v1502 = vpop.permute.xlu0 %1501
        %1505 = vset.pattern.permute.xlu0 0
        %1506 = vperm.xlu0 %1505, %v1480
        %v1507 = vpop.permute.xlu0 %1506
        %1510 = vset.pattern.permute.xlu0 0
        %1511 = vperm.xlu0 %1510, %v1481
        %v1512 = vpop.permute.xlu0 %1511
        %1515 = vset.pattern.permute.xlu0 0
        %1516 = vperm.xlu0 %1515, %v1482
        %v1517 = vpop.permute.xlu0 %1516
        %1520 = vset.pattern.permute.xlu0 0
        %1521 = vperm.xlu0 %1520, %v1483
        %v1522 = vpop.permute.xlu0 %1521
        %1525 = vset.pattern.permute.xlu0 0
        %1526 = vperm.xlu0 %1525, %v1484
        %v1527 = vpop.permute.xlu0 %1526
        %1530 = vset.pattern.permute.xlu0 0
        %1531 = vperm.xlu0 %1530, %v1485
        %v1532 = vpop.permute.xlu0 %1531
        %1535 = vset.pattern.permute.xlu0 0
        %1536 = vperm.xlu0 %1535, %v1486
        %v1537 = vpop.permute.xlu0 %1536
        %1540 = vset.pattern.permute.xlu0 0
        %1541 = vperm.xlu0 %1540, %v1487
        %v1542 = vpop.permute.xlu0 %1541
        %1545 = vset.pattern.permute.xlu0 0
        %1546 = vperm.xlu0 %1545, %v1488
        %v1547 = vpop.permute.xlu0 %1546
        %1550 = vset.pattern.permute.xlu0 0
        %1551 = vperm.xlu0 %1550, %v1489
        %v1552 = vpop.permute.xlu0 %1551
        %1555 = vset.pattern.permute.xlu0 0
        %1556 = vperm.xlu0 %1555, %v1490
        %v1557 = vpop.permute.xlu0 %1556
        %1560 = vset.pattern.permute.xlu0 0
        %1561 = vperm.xlu0 %1560, %v1491
        %v1562 = vpop.permute.xlu0 %1561
        %1565 = vset.pattern.permute.xlu0 0
        %1566 = vperm.xlu0 %1565, %v1492
        %v1567 = vpop.permute.xlu0 %1566
        %1570 = vset.pattern.permute.xlu0 0
        %1571 = vperm.xlu0 %1570, %v1493
        %v1572 = vpop.permute.xlu0 %1571
        %v1574 = vmul.f32 %v1497, %v1446
        %v1575 = vmul.f32 %v1497, %v1447
        %v1576 = vmul.f32 %v1502, %v1448
        %v1577 = vmul.f32 %v1502, %v1449
        %v1578 = vmul.f32 %v1507, %v1450
        %v1579 = vmul.f32 %v1507, %v1451
        %v1580 = vmul.f32 %v1512, %v1452
        %v1581 = vmul.f32 %v1512, %v1453
        %v1582 = vmul.f32 %v1517, %v1454
        %v1583 = vmul.f32 %v1517, %v1455
        %v1584 = vmul.f32 %v1522, %v1456
        %v1585 = vmul.f32 %v1522, %v1457
        %v1586 = vmul.f32 %v1527, %v1458
        %v1587 = vmul.f32 %v1527, %v1459
        %v1588 = vmul.f32 %v1532, %v1460
        %v1589 = vmul.f32 %v1532, %v1461
        %v1590 = vmul.f32 %v1537, %v1462
        %v1591 = vmul.f32 %v1537, %v1463
        %v1592 = vmul.f32 %v1542, %v1464
        %v1593 = vmul.f32 %v1542, %v1465
        %v1594 = vmul.f32 %v1547, %v1466
        %v1595 = vmul.f32 %v1547, %v1467
        %v1596 = vmul.f32 %v1552, %v1468
        %v1597 = vmul.f32 %v1552, %v1469
        %v1598 = vmul.f32 %v1557, %v1470
        %v1599 = vmul.f32 %v1557, %v1471
        %v1600 = vmul.f32 %v1562, %v1472
        %v1601 = vmul.f32 %v1562, %v1473
        %v1602 = vmul.f32 %v1567, %v1474
        %v1603 = vmul.f32 %v1567, %v1475
        %v1604 = vmul.f32 %v1572, %v1476
        %v1605 = vmul.f32 %v1572, %v1477
        %v1606 = vpack.c.bf16 %v899, %v897
        %v1607 = vpack.c.bf16 %v900, %v898
        %v1608 = vpack.c.bf16 %v903, %v901
        %v1609 = vpack.c.bf16 %v904, %v902
        %v1610 = vpack.c.bf16 %v907, %v905
        %v1611 = vpack.c.bf16 %v908, %v906
        %v1612 = vpack.c.bf16 %v911, %v909
        %v1613 = vpack.c.bf16 %v912, %v910
        %v1614 = vpack.c.bf16 %v915, %v913
        %v1615 = vpack.c.bf16 %v916, %v914
        %v1616 = vpack.c.bf16 %v919, %v917
        %v1617 = vpack.c.bf16 %v920, %v918
        %v1618 = vpack.c.bf16 %v923, %v921
        %v1619 = vpack.c.bf16 %v924, %v922
        %v1620 = vpack.c.bf16 %v927, %v925
        %v1621 = vpack.c.bf16 %v928, %v926
        %v1622 = vld [vmem:[%s6] sm:$0xff]
        %v1623 = vld [vmem:[%s6 + $0x8] sm:$0xff]
        %v1624 = vld [vmem:[%s6 + $0x10] sm:$0xff]
        %v1625 = vld [vmem:[%s6 + $0x18] sm:$0xff]
        %v1626 = vld [vmem:[%s6 + $0x20] sm:$0xff]
        %v1627 = vld [vmem:[%s6 + $0x28] sm:$0xff]
        %v1628 = vld [vmem:[%s6 + $0x30] sm:$0xff]
        %v1629 = vld [vmem:[%s6 + $0x38] sm:$0xff]
        %v1630 = vld [vmem:[%s6 + $0x40] sm:$0xff]
        %v1631 = vld [vmem:[%s6 + $0x48] sm:$0xff]
        %v1632 = vld [vmem:[%s6 + $0x50] sm:$0xff]
        %v1633 = vld [vmem:[%s6 + $0x58] sm:$0xff]
        %v1634 = vld [vmem:[%s6 + $0x60] sm:$0xff]
        %v1635 = vld [vmem:[%s6 + $0x68] sm:$0xff]
        %v1636 = vld [vmem:[%s6 + $0x70] sm:$0xff]
        %v1637 = vld [vmem:[%s6 + $0x78] sm:$0xff]
        %v1638 = vld [vmem:[%s6 + $0x80] sm:$0xff]
        %v1639 = vld [vmem:[%s6 + $0x88] sm:$0xff]
        %v1640 = vld [vmem:[%s6 + $0x90] sm:$0xff]
        %v1641 = vld [vmem:[%s6 + $0x98] sm:$0xff]
        %v1642 = vld [vmem:[%s6 + $0xa0] sm:$0xff]
        %v1643 = vld [vmem:[%s6 + $0xa8] sm:$0xff]
        %v1644 = vld [vmem:[%s6 + $0xb0] sm:$0xff]
        %v1645 = vld [vmem:[%s6 + $0xb8] sm:$0xff]
        %v1646 = vld [vmem:[%s6 + $0xc0] sm:$0xff]
        %v1647 = vld [vmem:[%s6 + $0xc8] sm:$0xff]
        %v1648 = vld [vmem:[%s6 + $0xd0] sm:$0xff]
        %v1649 = vld [vmem:[%s6 + $0xd8] sm:$0xff]
        %v1650 = vld [vmem:[%s6 + $0xe0] sm:$0xff]
        %v1651 = vld [vmem:[%s6 + $0xe8] sm:$0xff]
        %v1652 = vld [vmem:[%s6 + $0xf0] sm:$0xff]
        %v1653 = vld [vmem:[%s6 + $0xf8] sm:$0xff]
        %v1654 = vld [vmem:[%s7] sm:$0x3]
        %v1656 = vperm.slane %v1654, 0
        %v1657 = vperm.slane %v1654, 1
        %v1692 = vunpack.c.l.b16 %v1622
        %v1693 = vunpack.c.h.b16 %v1622
        %v1694 = vunpack.c.l.b16 %v1623
        %v1695 = vunpack.c.h.b16 %v1623
        %v1696 = vunpack.c.l.b16 %v1624
        %v1697 = vunpack.c.h.b16 %v1624
        %v1698 = vunpack.c.l.b16 %v1625
        %v1699 = vunpack.c.h.b16 %v1625
        %v1700 = vunpack.c.l.b16 %v1626
        %v1701 = vunpack.c.h.b16 %v1626
        %v1702 = vunpack.c.l.b16 %v1627
        %v1703 = vunpack.c.h.b16 %v1627
        %v1704 = vunpack.c.l.b16 %v1628
        %v1705 = vunpack.c.h.b16 %v1628
        %v1706 = vunpack.c.l.b16 %v1629
        %v1707 = vunpack.c.h.b16 %v1629
        %v1708 = vunpack.c.l.b16 %v1630
        %v1709 = vunpack.c.h.b16 %v1630
        %v1710 = vunpack.c.l.b16 %v1631
        %v1711 = vunpack.c.h.b16 %v1631
        %v1712 = vunpack.c.l.b16 %v1632
        %v1713 = vunpack.c.h.b16 %v1632
        %v1714 = vunpack.c.l.b16 %v1633
        %v1715 = vunpack.c.h.b16 %v1633
        %v1716 = vunpack.c.l.b16 %v1634
        %v1717 = vunpack.c.h.b16 %v1634
        %v1718 = vunpack.c.l.b16 %v1635
        %v1719 = vunpack.c.h.b16 %v1635
        %v1720 = vunpack.c.l.b16 %v1636
        %v1721 = vunpack.c.h.b16 %v1636
        %v1722 = vunpack.c.l.b16 %v1637
        %v1723 = vunpack.c.h.b16 %v1637
        %v1724 = vunpack.c.l.b16 %v1638
        %v1725 = vunpack.c.h.b16 %v1638
        %v1726 = vunpack.c.l.b16 %v1639
        %v1727 = vunpack.c.h.b16 %v1639
        %v1728 = vunpack.c.l.b16 %v1640
        %v1729 = vunpack.c.h.b16 %v1640
        %v1730 = vunpack.c.l.b16 %v1641
        %v1731 = vunpack.c.h.b16 %v1641
        %v1732 = vunpack.c.l.b16 %v1642
        %v1733 = vunpack.c.h.b16 %v1642
        %v1734 = vunpack.c.l.b16 %v1643
        %v1735 = vunpack.c.h.b16 %v1643
        %v1736 = vunpack.c.l.b16 %v1644
        %v1737 = vunpack.c.h.b16 %v1644
        %v1738 = vunpack.c.l.b16 %v1645
        %v1739 = vunpack.c.h.b16 %v1645
        %v1740 = vunpack.c.l.b16 %v1646
        %v1741 = vunpack.c.h.b16 %v1646
        %v1742 = vunpack.c.l.b16 %v1647
        %v1743 = vunpack.c.h.b16 %v1647
        %v1744 = vunpack.c.l.b16 %v1648
        %v1745 = vunpack.c.h.b16 %v1648
        %v1746 = vunpack.c.l.b16 %v1649
        %v1747 = vunpack.c.h.b16 %v1649
        %v1748 = vunpack.c.l.b16 %v1650
        %v1749 = vunpack.c.h.b16 %v1650
        %v1750 = vunpack.c.l.b16 %v1651
        %v1751 = vunpack.c.h.b16 %v1651
        %v1752 = vunpack.c.l.b16 %v1652
        %v1753 = vunpack.c.h.b16 %v1652
        %v1754 = vunpack.c.l.b16 %v1653
        %v1755 = vunpack.c.h.b16 %v1653
        %v1756 = vpack.c.b16 %v1694, %v1692
        %v1757 = vpack.c.b16 %v1695, %v1693
        %v1758 = vpack.c.b16 %v1698, %v1696
        %v1759 = vpack.c.b16 %v1699, %v1697
        %v1760 = vpack.c.b16 %v1702, %v1700
        %v1761 = vpack.c.b16 %v1703, %v1701
        %v1762 = vpack.c.b16 %v1706, %v1704
        %v1763 = vpack.c.b16 %v1707, %v1705
        %v1764 = vpack.c.b16 %v1710, %v1708
        %v1765 = vpack.c.b16 %v1711, %v1709
        %v1766 = vpack.c.b16 %v1714, %v1712
        %v1767 = vpack.c.b16 %v1715, %v1713
        %v1768 = vpack.c.b16 %v1718, %v1716
        %v1769 = vpack.c.b16 %v1719, %v1717
        %v1770 = vpack.c.b16 %v1722, %v1720
        %v1771 = vpack.c.b16 %v1723, %v1721
        %v1772 = vpack.c.b16 %v1726, %v1724
        %v1773 = vpack.c.b16 %v1727, %v1725
        %v1774 = vpack.c.b16 %v1730, %v1728
        %v1775 = vpack.c.b16 %v1731, %v1729
        %v1776 = vpack.c.b16 %v1734, %v1732
        %v1777 = vpack.c.b16 %v1735, %v1733
        %v1778 = vpack.c.b16 %v1738, %v1736
        %v1779 = vpack.c.b16 %v1739, %v1737
        %v1780 = vpack.c.b16 %v1742, %v1740
        %v1781 = vpack.c.b16 %v1743, %v1741
        %v1782 = vpack.c.b16 %v1746, %v1744
        %v1783 = vpack.c.b16 %v1747, %v1745
        %v1784 = vpack.c.b16 %v1750, %v1748
        %v1785 = vpack.c.b16 %v1751, %v1749
        %v1786 = vpack.c.b16 %v1754, %v1752
        %v1787 = vpack.c.b16 %v1755, %v1753
        %1820 = vmatpush.bf16.msra.mxu0 %v1770
        %1821 = vmatpush.bf16.msra.mxu0 %v1768
        %1822 = vmatpush.bf16.msra.mxu0 %v1766
        %1823 = vmatpush.bf16.msra.mxu0 %v1764
        %1824 = vmatpush.bf16.msra.mxu0 %v1762
        %1825 = vmatpush.bf16.msra.mxu0 %v1760
        %1826 = vmatpush.bf16.msra.mxu0 %v1758
        %1827 = vmatpush.bf16.msra.mxu0 %v1756
        %1828 = vmatmul.bf16.gmra.mxu0 %v1606
        %v1829 = vpop.f32.mrf.mxu0
        %v1830 = vadd.f32 %v1656, %v1829
        %v1831 = vpop.f32.mrf.mxu0
        %v1832 = vadd.f32 %v1656, %v1831
        %1833 = vmatmul.bf16.gmra.mxu0 %v1608
        %v1834 = vpop.f32.mrf.mxu0
        %v1835 = vadd.f32 %v1656, %v1834
        %v1836 = vpop.f32.mrf.mxu0
        %v1837 = vadd.f32 %v1656, %v1836
        %1838 = vmatmul.bf16.gmra.mxu0 %v1610
        %v1839 = vpop.f32.mrf.mxu0
        %v1840 = vadd.f32 %v1656, %v1839
        %v1841 = vpop.f32.mrf.mxu0
        %v1842 = vadd.f32 %v1656, %v1841
        %1843 = vmatmul.bf16.gmra.mxu0 %v1612
        %v1844 = vpop.f32.mrf.mxu0
        %v1845 = vadd.f32 %v1656, %v1844
        %v1846 = vpop.f32.mrf.mxu0
        %v1847 = vadd.f32 %v1656, %v1846
        %1848 = vmatmul.bf16.gmra.mxu0 %v1614
        %v1849 = vpop.f32.mrf.mxu0
        %v1850 = vadd.f32 %v1656, %v1849
        %v1851 = vpop.f32.mrf.mxu0
        %v1852 = vadd.f32 %v1656, %v1851
        %1853 = vmatmul.bf16.gmra.mxu0 %v1616
        %v1854 = vpop.f32.mrf.mxu0
        %v1855 = vadd.f32 %v1656, %v1854
        %v1856 = vpop.f32.mrf.mxu0
        %v1857 = vadd.f32 %v1656, %v1856
        %1858 = vmatmul.bf16.gmra.mxu0 %v1618
        %v1859 = vpop.f32.mrf.mxu0
        %v1860 = vadd.f32 %v1656, %v1859
        %v1861 = vpop.f32.mrf.mxu0
        %v1862 = vadd.f32 %v1656, %v1861
        %1863 = vmatmul.bf16.gmra.mxu0 %v1620
        %v1864 = vpop.f32.mrf.mxu0
        %v1865 = vadd.f32 %v1656, %v1864
        %v1866 = vpop.f32.mrf.mxu0
        %v1867 = vadd.f32 %v1656, %v1866
        %1868 = vdwg.mxu0
        %1869 = vmatpush.bf16.msra.mxu0 %v1786
        %1870 = vmatpush.bf16.msra.mxu0 %v1784
        %1871 = vmatpush.bf16.msra.mxu0 %v1782
        %1872 = vmatpush.bf16.msra.mxu0 %v1780
        %1873 = vmatpush.bf16.msra.mxu0 %v1778
        %1874 = vmatpush.bf16.msra.mxu0 %v1776
        %1875 = vmatpush.bf16.msra.mxu0 %v1774
        %1876 = vmatpush.bf16.msra.mxu0 %v1772
        %1877 = vmatmul.bf16.gmra.mxu0 %v1607
        %v1878 = vpop.f32.mrf.mxu0
        %v1879 = vadd.f32 %v1830, %v1878
        %v1880 = vpop.f32.mrf.mxu0
        %v1881 = vadd.f32 %v1832, %v1880
        %1882 = vmatmul.bf16.gmra.mxu0 %v1609
        %v1883 = vpop.f32.mrf.mxu0
        %v1884 = vadd.f32 %v1835, %v1883
        %v1885 = vpop.f32.mrf.mxu0
        %v1886 = vadd.f32 %v1837, %v1885
        %1887 = vmatmul.bf16.gmra.mxu0 %v1611
        %v1888 = vpop.f32.mrf.mxu0
        %v1889 = vadd.f32 %v1840, %v1888
        %v1890 = vpop.f32.mrf.mxu0
        %v1891 = vadd.f32 %v1842, %v1890
        %1892 = vmatmul.bf16.gmra.mxu0 %v1613
        %v1893 = vpop.f32.mrf.mxu0
        %v1894 = vadd.f32 %v1845, %v1893
        %v1895 = vpop.f32.mrf.mxu0
        %v1896 = vadd.f32 %v1847, %v1895
        %1897 = vmatmul.bf16.gmra.mxu0 %v1615
        %v1898 = vpop.f32.mrf.mxu0
        %v1899 = vadd.f32 %v1850, %v1898
        %v1900 = vpop.f32.mrf.mxu0
        %v1901 = vadd.f32 %v1852, %v1900
        %1902 = vmatmul.bf16.gmra.mxu0 %v1617
        %v1903 = vpop.f32.mrf.mxu0
        %v1904 = vadd.f32 %v1855, %v1903
        %v1905 = vpop.f32.mrf.mxu0
        %v1906 = vadd.f32 %v1857, %v1905
        %1907 = vmatmul.bf16.gmra.mxu0 %v1619
        %v1908 = vpop.f32.mrf.mxu0
        %v1909 = vadd.f32 %v1860, %v1908
        %v1910 = vpop.f32.mrf.mxu0
        %v1911 = vadd.f32 %v1862, %v1910
        %1912 = vmatmul.bf16.gmra.mxu0 %v1621
        %v1913 = vpop.f32.mrf.mxu0
        %v1914 = vadd.f32 %v1865, %v1913
        %v1915 = vpop.f32.mrf.mxu0
        %v1916 = vadd.f32 %v1867, %v1915
        %1917 = vdwg.mxu0
        %1918 = vmatpush.bf16.msra.mxu0 %v1771
        %1919 = vmatpush.bf16.msra.mxu0 %v1769
        %1920 = vmatpush.bf16.msra.mxu0 %v1767
        %1921 = vmatpush.bf16.msra.mxu0 %v1765
        %1922 = vmatpush.bf16.msra.mxu0 %v1763
        %1923 = vmatpush.bf16.msra.mxu0 %v1761
        %1924 = vmatpush.bf16.msra.mxu0 %v1759
        %1925 = vmatpush.bf16.msra.mxu0 %v1757
        %1926 = vmatmul.bf16.gmra.mxu0 %v1606
        %v1927 = vpop.f32.mrf.mxu0
        %v1928 = vadd.f32 %v1657, %v1927
        %v1929 = vpop.f32.mrf.mxu0
        %v1930 = vadd.f32 %v1657, %v1929
        %1931 = vmatmul.bf16.gmra.mxu0 %v1608
        %v1932 = vpop.f32.mrf.mxu0
        %v1933 = vadd.f32 %v1657, %v1932
        %v1934 = vpop.f32.mrf.mxu0
        %v1935 = vadd.f32 %v1657, %v1934
        %1936 = vmatmul.bf16.gmra.mxu0 %v1610
        %v1937 = vpop.f32.mrf.mxu0
        %v1938 = vadd.f32 %v1657, %v1937
        %v1939 = vpop.f32.mrf.mxu0
        %v1940 = vadd.f32 %v1657, %v1939
        %1941 = vmatmul.bf16.gmra.mxu0 %v1612
        %v1942 = vpop.f32.mrf.mxu0
        %v1943 = vadd.f32 %v1657, %v1942
        %v1944 = vpop.f32.mrf.mxu0
        %v1945 = vadd.f32 %v1657, %v1944
        %1946 = vmatmul.bf16.gmra.mxu0 %v1614
        %v1947 = vpop.f32.mrf.mxu0
        %v1948 = vadd.f32 %v1657, %v1947
        %v1949 = vpop.f32.mrf.mxu0
        %v1950 = vadd.f32 %v1657, %v1949
        %1951 = vmatmul.bf16.gmra.mxu0 %v1616
        %v1952 = vpop.f32.mrf.mxu0
        %v1953 = vadd.f32 %v1657, %v1952
        %v1954 = vpop.f32.mrf.mxu0
        %v1955 = vadd.f32 %v1657, %v1954
        %1956 = vmatmul.bf16.gmra.mxu0 %v1618
        %v1957 = vpop.f32.mrf.mxu0
        %v1958 = vadd.f32 %v1657, %v1957
        %v1959 = vpop.f32.mrf.mxu0
        %v1960 = vadd.f32 %v1657, %v1959
        %1961 = vmatmul.bf16.gmra.mxu0 %v1620
        %v1962 = vpop.f32.mrf.mxu0
        %v1963 = vadd.f32 %v1657, %v1962
        %v1964 = vpop.f32.mrf.mxu0
        %v1965 = vadd.f32 %v1657, %v1964
        %1966 = vdwg.mxu0
        %1967 = vmatpush.bf16.msra.mxu0 %v1787
        %1968 = vmatpush.bf16.msra.mxu0 %v1785
        %1969 = vmatpush.bf16.msra.mxu0 %v1783
        %1970 = vmatpush.bf16.msra.mxu0 %v1781
        %1971 = vmatpush.bf16.msra.mxu0 %v1779
        %1972 = vmatpush.bf16.msra.mxu0 %v1777
        %1973 = vmatpush.bf16.msra.mxu0 %v1775
        %1974 = vmatpush.bf16.msra.mxu0 %v1773
        %1975 = vmatmul.bf16.gmra.mxu0 %v1607
        %v1976 = vpop.f32.mrf.mxu0
        %v1977 = vadd.f32 %v1928, %v1976
        %v1978 = vpop.f32.mrf.mxu0
        %v1979 = vadd.f32 %v1930, %v1978
        %1980 = vmatmul.bf16.gmra.mxu0 %v1609
        %v1981 = vpop.f32.mrf.mxu0
        %v1982 = vadd.f32 %v1933, %v1981
        %v1983 = vpop.f32.mrf.mxu0
        %v1984 = vadd.f32 %v1935, %v1983
        %1985 = vmatmul.bf16.gmra.mxu0 %v1611
        %v1986 = vpop.f32.mrf.mxu0
        %v1987 = vadd.f32 %v1938, %v1986
        %v1988 = vpop.f32.mrf.mxu0
        %v1989 = vadd.f32 %v1940, %v1988
        %1990 = vmatmul.bf16.gmra.mxu0 %v1613
        %v1991 = vpop.f32.mrf.mxu0
        %v1992 = vadd.f32 %v1943, %v1991
        %v1993 = vpop.f32.mrf.mxu0
        %v1994 = vadd.f32 %v1945, %v1993
        %1995 = vmatmul.bf16.gmra.mxu0 %v1615
        %v1996 = vpop.f32.mrf.mxu0
        %v1997 = vadd.f32 %v1948, %v1996
        %v1998 = vpop.f32.mrf.mxu0
        %v1999 = vadd.f32 %v1950, %v1998
        %2000 = vmatmul.bf16.gmra.mxu0 %v1617
        %v2001 = vpop.f32.mrf.mxu0
        %v2002 = vadd.f32 %v1953, %v2001
        %v2003 = vpop.f32.mrf.mxu0
        %v2004 = vadd.f32 %v1955, %v2003
        %2005 = vmatmul.bf16.gmra.mxu0 %v1619
        %v2006 = vpop.f32.mrf.mxu0
        %v2007 = vadd.f32 %v1958, %v2006
        %v2008 = vpop.f32.mrf.mxu0
        %v2009 = vadd.f32 %v1960, %v2008
        %2010 = vmatmul.bf16.gmra.mxu0 %v1621
        %v2011 = vpop.f32.mrf.mxu0
        %v2012 = vadd.f32 %v1963, %v2011
        %v2013 = vpop.f32.mrf.mxu0
        %v2014 = vadd.f32 %v1965, %v2013
        %2015 = vdwg.mxu0
        %2016 = vst [vmem:[%s436] sm:$0xff] %v1446
        %2017 = vst [vmem:[%s436 + $0x8] sm:$0xff] %v1447
        %2018 = vst [vmem:[%s436 + $0x10] sm:$0xff] %v1448
        %2019 = vst [vmem:[%s436 + $0x18] sm:$0xff] %v1449
        %2020 = vst [vmem:[%s436 + $0x20] sm:$0xff] %v1450
        %2021 = vst [vmem:[%s436 + $0x28] sm:$0xff] %v1451
        %2022 = vst [vmem:[%s436 + $0x30] sm:$0xff] %v1452
        %2023 = vst [vmem:[%s436 + $0x38] sm:$0xff] %v1453
        %2024 = vst [vmem:[%s436 + $0x40] sm:$0xff] %v1454
        %2025 = vst [vmem:[%s436 + $0x48] sm:$0xff] %v1455
        %2026 = vst [vmem:[%s436 + $0x50] sm:$0xff] %v1456
        %2027 = vst [vmem:[%s436 + $0x58] sm:$0xff] %v1457
        %2028 = vst [vmem:[%s436 + $0x60] sm:$0xff] %v1458
        %2029 = vst [vmem:[%s436 + $0x68] sm:$0xff] %v1459
        %2030 = vst [vmem:[%s436 + $0x70] sm:$0xff] %v1460
        %2031 = vst [vmem:[%s436 + $0x78] sm:$0xff] %v1461
        %2032 = vst [vmem:[%s436 + $0x80] sm:$0xff] %v1462
        %2033 = vst [vmem:[%s436 + $0x88] sm:$0xff] %v1463
        %2034 = vst [vmem:[%s436 + $0x90] sm:$0xff] %v1464
        %2035 = vst [vmem:[%s436 + $0x98] sm:$0xff] %v1465
        %2036 = vst [vmem:[%s436 + $0xa0] sm:$0xff] %v1466
        %2037 = vst [vmem:[%s436 + $0xa8] sm:$0xff] %v1467
        %2038 = vst [vmem:[%s436 + $0xb0] sm:$0xff] %v1468
        %2039 = vst [vmem:[%s436 + $0xb8] sm:$0xff] %v1469
        %2040 = vst [vmem:[%s436 + $0xc0] sm:$0xff] %v1470
        %2041 = vst [vmem:[%s436 + $0xc8] sm:$0xff] %v1471
        %2042 = vst [vmem:[%s436 + $0xd0] sm:$0xff] %v1472
        %2043 = vst [vmem:[%s436 + $0xd8] sm:$0xff] %v1473
        %2044 = vst [vmem:[%s436 + $0xe0] sm:$0xff] %v1474
        %2045 = vst [vmem:[%s436 + $0xe8] sm:$0xff] %v1475
        %2046 = vst [vmem:[%s436 + $0xf0] sm:$0xff] %v1476
        %2047 = vst [vmem:[%s436 + $0xf8] sm:$0xff] %v1477
        %2048 = vst [vmem:[%s443] sm:$0xff] %v1105
        %2049 = vst [vmem:[%s443 + $0x8] sm:$0xff] %v1106
        %2050 = vst [vmem:[%s443 + $0x10] sm:$0xff] %v1107
        %2051 = vst [vmem:[%s443 + $0x18] sm:$0xff] %v1108
        %2052 = vst [vmem:[%s443 + $0x20] sm:$0xff] %v1109
        %2053 = vst [vmem:[%s443 + $0x28] sm:$0xff] %v1110
        %2054 = vst [vmem:[%s443 + $0x30] sm:$0xff] %v1111
        %2055 = vst [vmem:[%s443 + $0x38] sm:$0xff] %v1112
        %2056 = vst [vmem:[%s443 + $0x40] sm:$0xff] %v1113
        %2057 = vst [vmem:[%s443 + $0x48] sm:$0xff] %v1114
        %2058 = vst [vmem:[%s443 + $0x50] sm:$0xff] %v1115
        %2059 = vst [vmem:[%s443 + $0x58] sm:$0xff] %v1116
        %2060 = vst [vmem:[%s443 + $0x60] sm:$0xff] %v1117
        %2061 = vst [vmem:[%s443 + $0x68] sm:$0xff] %v1118
        %2062 = vst [vmem:[%s443 + $0x70] sm:$0xff] %v1119
        %2063 = vst [vmem:[%s443 + $0x78] sm:$0xff] %v1120
        %2064 = vst [vmem:[%s443 + $0x80] sm:$0xff] %v1121
        %2065 = vst [vmem:[%s443 + $0x88] sm:$0xff] %v1122
        %2066 = vst [vmem:[%s443 + $0x90] sm:$0xff] %v1123
        %2067 = vst [vmem:[%s443 + $0x98] sm:$0xff] %v1124
        %2068 = vst [vmem:[%s443 + $0xa0] sm:$0xff] %v1125
        %2069 = vst [vmem:[%s443 + $0xa8] sm:$0xff] %v1126
        %2070 = vst [vmem:[%s443 + $0xb0] sm:$0xff] %v1127
        %2071 = vst [vmem:[%s443 + $0xb8] sm:$0xff] %v1128
        %2072 = vst [vmem:[%s443 + $0xc0] sm:$0xff] %v1129
        %2073 = vst [vmem:[%s443 + $0xc8] sm:$0xff] %v1130
        %2074 = vst [vmem:[%s443 + $0xd0] sm:$0xff] %v1131
        %2075 = vst [vmem:[%s443 + $0xd8] sm:$0xff] %v1132
        %2076 = vst [vmem:[%s443 + $0xe0] sm:$0xff] %v1133
        %2077 = vst [vmem:[%s443 + $0xe8] sm:$0xff] %v1134
        %2078 = vst [vmem:[%s443 + $0xf0] sm:$0xff] %v1135
        %2079 = vst [vmem:[%s443 + $0xf8] sm:$0xff] %v1136
        %2080 = vst [vmem:[%s450] sm:$0xff] %v1574
        %2081 = vst [vmem:[%s450 + $0x8] sm:$0xff] %v1575
        %2082 = vst [vmem:[%s450 + $0x10] sm:$0xff] %v1576
        %2083 = vst [vmem:[%s450 + $0x18] sm:$0xff] %v1577
        %2084 = vst [vmem:[%s450 + $0x20] sm:$0xff] %v1578
        %2085 = vst [vmem:[%s450 + $0x28] sm:$0xff] %v1579
        %2086 = vst [vmem:[%s450 + $0x30] sm:$0xff] %v1580
        %2087 = vst [vmem:[%s450 + $0x38] sm:$0xff] %v1581
        %2088 = vst [vmem:[%s450 + $0x40] sm:$0xff] %v1582
        %2089 = vst [vmem:[%s450 + $0x48] sm:$0xff] %v1583
        %2090 = vst [vmem:[%s450 + $0x50] sm:$0xff] %v1584
        %2091 = vst [vmem:[%s450 + $0x58] sm:$0xff] %v1585
        %2092 = vst [vmem:[%s450 + $0x60] sm:$0xff] %v1586
        %2093 = vst [vmem:[%s450 + $0x68] sm:$0xff] %v1587
        %2094 = vst [vmem:[%s450 + $0x70] sm:$0xff] %v1588
        %2095 = vst [vmem:[%s450 + $0x78] sm:$0xff] %v1589
        %2096 = vst [vmem:[%s450 + $0x80] sm:$0xff] %v1590
        %2097 = vst [vmem:[%s450 + $0x88] sm:$0xff] %v1591
        %2098 = vst [vmem:[%s450 + $0x90] sm:$0xff] %v1592
        %2099 = vst [vmem:[%s450 + $0x98] sm:$0xff] %v1593
        %2100 = vst [vmem:[%s450 + $0xa0] sm:$0xff] %v1594
        %2101 = vst [vmem:[%s450 + $0xa8] sm:$0xff] %v1595
        %2102 = vst [vmem:[%s450 + $0xb0] sm:$0xff] %v1596
        %2103 = vst [vmem:[%s450 + $0xb8] sm:$0xff] %v1597
        %2104 = vst [vmem:[%s450 + $0xc0] sm:$0xff] %v1598
        %2105 = vst [vmem:[%s450 + $0xc8] sm:$0xff] %v1599
        %2106 = vst [vmem:[%s450 + $0xd0] sm:$0xff] %v1600
        %2107 = vst [vmem:[%s450 + $0xd8] sm:$0xff] %v1601
        %2108 = vst [vmem:[%s450 + $0xe0] sm:$0xff] %v1602
        %2109 = vst [vmem:[%s450 + $0xe8] sm:$0xff] %v1603
        %2110 = vst [vmem:[%s450 + $0xf0] sm:$0xff] %v1604
        %2111 = vst [vmem:[%s450 + $0xf8] sm:$0xff] %v1605
        %2112 = vst [vmem:[%s457] sm:$0xff] %v1879
        %2113 = vst [vmem:[%s457 + $0x8] sm:$0xff] %v1977
        %2114 = vst [vmem:[%s457 + $0x10] sm:$0xff] %v1881
        %2115 = vst [vmem:[%s457 + $0x18] sm:$0xff] %v1979
        %2116 = vst [vmem:[%s457 + $0x20] sm:$0xff] %v1884
        %2117 = vst [vmem:[%s457 + $0x28] sm:$0xff] %v1982
        %2118 = vst [vmem:[%s457 + $0x30] sm:$0xff] %v1886
        %2119 = vst [vmem:[%s457 + $0x38] sm:$0xff] %v1984
        %2120 = vst [vmem:[%s457 + $0x40] sm:$0xff] %v1889
        %2121 = vst [vmem:[%s457 + $0x48] sm:$0xff] %v1987
        %2122 = vst [vmem:[%s457 + $0x50] sm:$0xff] %v1891
        %2123 = vst [vmem:[%s457 + $0x58] sm:$0xff] %v1989
        %2124 = vst [vmem:[%s457 + $0x60] sm:$0xff] %v1894
        %2125 = vst [vmem:[%s457 + $0x68] sm:$0xff] %v1992
        %2126 = vst [vmem:[%s457 + $0x70] sm:$0xff] %v1896
        %2127 = vst [vmem:[%s457 + $0x78] sm:$0xff] %v1994
        %2128 = vst [vmem:[%s457 + $0x80] sm:$0xff] %v1899
        %2129 = vst [vmem:[%s457 + $0x88] sm:$0xff] %v1997
        %2130 = vst [vmem:[%s457 + $0x90] sm:$0xff] %v1901
        %2131 = vst [vmem:[%s457 + $0x98] sm:$0xff] %v1999
        %2132 = vst [vmem:[%s457 + $0xa0] sm:$0xff] %v1904
        %2133 = vst [vmem:[%s457 + $0xa8] sm:$0xff] %v2002
        %2134 = vst [vmem:[%s457 + $0xb0] sm:$0xff] %v1906
        %2135 = vst [vmem:[%s457 + $0xb8] sm:$0xff] %v2004
        %2136 = vst [vmem:[%s457 + $0xc0] sm:$0xff] %v1909
        %2137 = vst [vmem:[%s457 + $0xc8] sm:$0xff] %v2007
        %2138 = vst [vmem:[%s457 + $0xd0] sm:$0xff] %v1911
        %2139 = vst [vmem:[%s457 + $0xd8] sm:$0xff] %v2009
        %2140 = vst [vmem:[%s457 + $0xe0] sm:$0xff] %v1914
        %2141 = vst [vmem:[%s457 + $0xe8] sm:$0xff] %v2012
        %2142 = vst [vmem:[%s457 + $0xf0] sm:$0xff] %v1916
        %2143 = vst [vmem:[%s457 + $0xf8] sm:$0xff] %v2014
        %s2144 = sand.u32 %s224, 1
        %s2145 = scalar_lea.sflag [#allocation4], %s2144
        %s2146 = sand.u32 %s224, 1
        %s2147 = smul.addr %s2146, 256
        %s2148 = scalar_lea.vmem [#allocation5], %s2147
        %s2149 = sand.u32 %s33, 1
        %s2150 = scalar_lea.sflag [#allocation7], %s2149
        %s2151 = sand.u32 %s250, 1
        %s2152 = smul.addr %s2151, 256
        %s2153 = scalar_lea.vmem [#allocation6], %s2152
        %s2154 = sand.u32 %s33, 1
        %s2155 = scalar_lea.sflag [#allocation7], %s2154
        %s2156 = sand.u32 %s276, 1
        %s2157 = smul.addr %s2156, 256
        %s2158 = scalar_lea.vmem [#allocation8], %s2157
        %s2159 = sand.u32 %s302, 1
        %s2160 = scalar_lea.sflag [#allocation10], %s2159
        %s2161 = sand.u32 %s302, 1
        %s2162 = smul.addr %s2161, 256
        %s2163 = scalar_lea.vmem [#allocation9], %s2162
        // Predicated region
        $region57: #{tpu_custom_call.1} parent=51 // pred_check
          %p2164 = pneg %p234
        $region58: #{tpu_custom_call.1} parent=51 // pred_check_branch
          %2166 = sbr.rel (%p2164) target = $region60
        $region59: #{tpu_custom_call.1} parent=51 // pred_region
          %s2167 = smul.u32 16, %s33
          %2169 = vsyncadd %s2145, 0
          %s2170 = smul.addr %s2167, 2
          %s2171 = smul.addr %s2170, 8
          %s2172 = scalar_lea.hbm %s8, %s2171
          %s2173 = sshll.u32 %s2148, 4
          %s2174 = int_to_ptr.vmem [resolvable:$true] %s2173
          %s2175 = sshll.u32 %s2172, 4
          %s2176 = int_to_ptr.hbm [resolvable:$true] %s2175
          %2181 = dma.vmem_to_hbm [thread:$0]  %s2174, 4096, %s2176, %s2145, 256, 256, 16
        $region60: #{tpu_custom_call.1} parent=51 // pred_fallthru
          _
        // Predicated region
        $region61: #{tpu_custom_call.1} parent=51 // pred_check
          %p2182 = pneg %p260
        $region62: #{tpu_custom_call.1} parent=51 // pred_check_branch
          %2184 = sbr.rel (%p2182) target = $region64
        $region63: #{tpu_custom_call.1} parent=51 // pred_region
          %s2185 = smul.u32 16, %s33
          %2187 = vsyncadd %s2150, 0
          %s2188 = smul.addr %s2185, 2
          %s2189 = smul.addr %s2188, 8
          %s2190 = scalar_lea.hbm %s9, %s2189
          %s2191 = sshll.u32 %s2153, 4
          %s2192 = int_to_ptr.vmem [resolvable:$true] %s2191
          %s2193 = sshll.u32 %s2190, 4
          %s2194 = int_to_ptr.hbm [resolvable:$true] %s2193
          %2199 = dma.vmem_to_hbm [thread:$0]  %s2192, 4096, %s2194, %s2150, 256, 256, 16
        $region64: #{tpu_custom_call.1} parent=51 // pred_fallthru
          _
        // Predicated region
        $region65: #{tpu_custom_call.1} parent=51 // pred_check
          %p2200 = pneg %p286
        $region66: #{tpu_custom_call.1} parent=51 // pred_check_branch
          %2202 = sbr.rel (%p2200) target = $region68
        $region67: #{tpu_custom_call.1} parent=51 // pred_region
          %s2203 = smul.u32 16, %s33
          %2205 = vsyncadd %s2155, 0
          %s2206 = smul.addr %s2203, 2
          %s2207 = smul.addr %s2206, 8
          %s2208 = scalar_lea.hbm %s10, %s2207
          %s2209 = sshll.u32 %s2158, 4
          %s2210 = int_to_ptr.vmem [resolvable:$true] %s2209
          %s2211 = sshll.u32 %s2208, 4
          %s2212 = int_to_ptr.hbm [resolvable:$true] %s2211
          %2217 = dma.vmem_to_hbm [thread:$0]  %s2210, 4096, %s2212, %s2155, 256, 256, 16
        $region68: #{tpu_custom_call.1} parent=51 // pred_fallthru
          _
        // Predicated region
        $region69: #{tpu_custom_call.1} parent=51 // pred_check
          %p2218 = pneg %p312
        $region70: #{tpu_custom_call.1} parent=51 // pred_check_branch
          %2220 = sbr.rel (%p2218) target = $region72
        $region71: #{tpu_custom_call.1} parent=51 // pred_region
          %s2221 = smul.u32 16, %s33
          %2223 = vsyncadd %s2160, 0
          %s2224 = smul.addr %s2221, 2
          %s2225 = smul.addr %s2224, 8
          %s2226 = scalar_lea.hbm %s11, %s2225
          %s2227 = sshll.u32 %s2163, 4
          %s2228 = int_to_ptr.vmem [resolvable:$true] %s2227
          %s2229 = sshll.u32 %s2226, 4
          %s2230 = int_to_ptr.hbm [resolvable:$true] %s2229
          %2235 = dma.vmem_to_hbm [thread:$0]  %s2228, 4096, %s2230, %s2160, 256, 256, 16
        $region72: #{tpu_custom_call.1} parent=51 // pred_fallthru
          _
      $region52: #{tpu_custom_call.1} parent=5 // pred_fallthru
        _
      %p2236 = scmp.le.s32.totalorder 2, %s28
      // Predicated region
      $region73: #{tpu_custom_call.1} parent=5 // pred_check
        %p2237 = pneg %p2236
      $region74: #{tpu_custom_call.1} parent=5 // pred_check_branch
        %2239 = sbr.rel (%p2237) target = $region76
      $region75: #{tpu_custom_call.1} parent=5 // pred_region
        %s2240 = ssub.s32 %s28, 2
        // Predicated region
        $region77: #{tpu_custom_call.1} parent=75 // pred_check
          %p2241 = pneg %p240
        $region78: #{tpu_custom_call.1} parent=75 // pred_check_branch
          %2243 = sbr.rel (%p2241) target = $region80
        $region79: #{tpu_custom_call.1} parent=75 // pred_region
          %s2244 = sand.u32 %s225, 1
          %s2245 = scalar_lea.sflag [#allocation4], %s2244
          %s2246 = sand.u32 %s225, 1
          %s2247 = smul.addr %s2246, 256
          %s2248 = scalar_lea.vmem [#allocation5], %s2247
          %2250 = dma.done %s2245, 4096
        $region80: #{tpu_custom_call.1} parent=75 // pred_fallthru
          _
        // Predicated region
        $region81: #{tpu_custom_call.1} parent=75 // pred_check
          %p2251 = pneg %p266
        $region82: #{tpu_custom_call.1} parent=75 // pred_check_branch
          %2253 = sbr.rel (%p2251) target = $region84
        $region83: #{tpu_custom_call.1} parent=75 // pred_region
          %s2254 = sand.u32 %s34, 1
          %s2255 = scalar_lea.sflag [#allocation7], %s2254
          %s2256 = sand.u32 %s251, 1
          %s2257 = smul.addr %s2256, 256
          %s2258 = scalar_lea.vmem [#allocation6], %s2257
          %2260 = dma.done %s2255, 4096
        $region84: #{tpu_custom_call.1} parent=75 // pred_fallthru
          _
        // Predicated region
        $region85: #{tpu_custom_call.1} parent=75 // pred_check
          %p2261 = pneg %p292
        $region86: #{tpu_custom_call.1} parent=75 // pred_check_branch
          %2263 = sbr.rel (%p2261) target = $region88
        $region87: #{tpu_custom_call.1} parent=75 // pred_region
          %s2264 = sand.u32 %s34, 1
          %s2265 = scalar_lea.sflag [#allocation7], %s2264
          %s2266 = sand.u32 %s277, 1
          %s2267 = smul.addr %s2266, 256
          %s2268 = scalar_lea.vmem [#allocation8], %s2267
          %2270 = dma.done %s2265, 4096
        $region88: #{tpu_custom_call.1} parent=75 // pred_fallthru
          _
        // Predicated region
        $region89: #{tpu_custom_call.1} parent=75 // pred_check
          %p2271 = pneg %p318
        $region90: #{tpu_custom_call.1} parent=75 // pred_check_branch
          %2273 = sbr.rel (%p2271) target = $region92
        $region91: #{tpu_custom_call.1} parent=75 // pred_region
          %s2274 = sand.u32 %s303, 1
          %s2275 = scalar_lea.sflag [#allocation10], %s2274
          %s2276 = sand.u32 %s303, 1
          %s2277 = smul.addr %s2276, 256
          %s2278 = scalar_lea.vmem [#allocation9], %s2277
          %2280 = dma.done %s2275, 4096
        $region92: #{tpu_custom_call.1} parent=75 // pred_fallthru
          _
      $region76: #{tpu_custom_call.1} parent=5 // pred_fallthru
        _
    $region6: #{tpu_custom_call.1} parent=1 // loop_footer
      %s32 = sadd.s32 1, %s28
    $region7: #{tpu_custom_call.1} parent=1 // loop_footer_branch
      %27 = sbr.rel target = $region3
    $region8: #{tpu_custom_call.1} parent=1 // loop_exit
      _
    %2281 = vsyncpa [#allocation3], 1
    %s2282 = scalar_lea.sflag [#allocation3], 1
    %2283 = vsyncpa %s2282, 1
    %2284 = vsyncpa [#allocation4], 1
    %s2285 = scalar_lea.sflag [#allocation4], 1
    %2286 = vsyncpa %s2285, 1
    %2287 = vsyncpa [#allocation7], 1
    %s2288 = scalar_lea.sflag [#allocation7], 1
    %2289 = vsyncpa %s2288, 1
    %2290 = vsyncpa [#allocation10], 1
    %s2291 = scalar_lea.sflag [#allocation10], 1
    %2292 = vsyncpa %s2291, 1

</llo_original>
